<compile_context>
chip_gen: v7x
topology: tpu7x:2x2x1
jax: 0.10.0
libtpu: 0.0.40
codegen_flags: <defaults>
</compile_context>

<pallas_src>
import jax
import jax.numpy as jnp
from jax.experimental import pallas as pl
from jax.experimental.pallas import tpu as pltpu


def _round_up(n, m):
    return ((n + m - 1) // m) * m


def fc_encoder_kernel(x_ref, w1_ref, b1_ref, w2_ref, b2_ref, o_ref):
    # Per-tile cast to bf16 (free on the VPU, hidden under MXU/DMA).
    x = x_ref[...].astype(jnp.bfloat16)
    # fc1 on the MXU: bf16 x bf16 -> f32 accumulation.
    h = jnp.dot(x, w1_ref[...], preferred_element_type=jnp.float32)
    # bias + leaky_relu(0.2) epilogue in f32 on the VPU.
    h = h + b1_ref[...]
    h = jnp.where(h > 0, h, 0.2 * h)
    # fc2: bf16 back into the MXU, f32 accumulation, lane-dense (128-wide) out.
    out = jnp.dot(h.astype(jnp.bfloat16), w2_ref[...],
                  preferred_element_type=jnp.float32)
    out = out + b2_ref[...]
    o_ref[...] = out.astype(o_ref.dtype)


def fc_encoder(x, w1, b1, w2, b2, *, out_sz=None, tm=1024):
    """x: [B, im_sz] (f32); w1: [im_sz, h_pad] bf16; b1: [1, h_pad] f32;
    w2: [h_pad, out_pad] bf16; b2: [1, out_pad] f32.

    Weights are stored pre-transposed ([in, out]) so the kernel does plain
    row-major matmuls on the MXU.  out_sz selects the logical (unpadded)
    output width; defaults to the padded width.
    """
    B, im_sz = x.shape
    h_pad = w1.shape[1]
    out_pad = w2.shape[1]
    if out_sz is None:
        out_sz = out_pad
    out_dtype = x.dtype

    # Weights cached as bf16 at init; this is a no-op if already bf16.
    if w1.dtype != jnp.bfloat16:
        w1 = w1.astype(jnp.bfloat16)
    if w2.dtype != jnp.bfloat16:
        w2 = w2.astype(jnp.bfloat16)
    b1 = b1.astype(jnp.float32)
    b2 = b2.astype(jnp.float32)

    # Batch tile: 16-aligned (bf16 packs 16 rows per sublane group), capped at
    # the (16-aligned) batch.
    tm = min(tm, _round_up(B, 16))
    tm = _round_up(tm, 16)
    num_steps = pl.cdiv(B, tm)
    if num_steps == 1 and B > 16:
        # Guarantee >= 2 grid steps so v7x's second TensorCore gets work.
        tm = _round_up(pl.cdiv(B, 2), 16)
        num_steps = pl.cdiv(B, tm)
    grid = (num_steps,)

    cost = pl.CostEstimate(
        flops=2 * B * (im_sz * h_pad + h_pad * out_pad),
        transcendentals=0,
        bytes_accessed=(x.size * 4 + w1.size * 2 + w2.size * 2
                        + b1.size * 4 + b2.size * 4 + B * out_pad * 4),
    )

    out = pl.pallas_call(
        fc_encoder_kernel,
        out_shape=jax.ShapeDtypeStruct((B, out_pad), out_dtype),
        grid=grid,
        in_specs=[
            pl.BlockSpec((tm, im_sz), lambda i: (i, 0)),       # x: tiled over batch
            pl.BlockSpec((im_sz, h_pad), lambda i: (0, 0)),    # w1: VMEM-resident
            pl.BlockSpec((1, h_pad), lambda i: (0, 0)),        # b1: VMEM-resident
            pl.BlockSpec((h_pad, out_pad), lambda i: (0, 0)),  # w2: VMEM-resident
            pl.BlockSpec((1, out_pad), lambda i: (0, 0)),      # b2: VMEM-resident
        ],
        out_specs=pl.BlockSpec((tm, out_pad), lambda i: (i, 0)),
        compiler_params=pltpu.CompilerParams(
            dimension_semantics=("parallel",),   # v7x: shard batch over 2 TCs
            vmem_limit_bytes=32 << 20,
        ),
        cost_estimate=cost,
    )(x, w1, b1, w2, b2)
    return out[:, :out_sz]


def init_params(key, z_sz=10, h_sz=400, im_sz=784, dtype=jnp.float32,
                lane_pad=128):
    """Deterministic synthetic init (mimics PyTorch Linear's uniform fan-in scale).

    Hidden dim is zero-padded to a lane multiple (400 -> 512) and the output
    dim is zero-padded to 128 (20 -> 128) so both matmul N axes and the output
    store are lane-dense.  Padded units carry exact-zero weights and biases,
    so the forward pass is bit-identical on the logical 20 output columns.
    Weights are returned pre-transposed ([in, out]) and pre-cast to bf16.
    """
    k1, k2, k3, k4 = jax.random.split(key, 4)
    lim1 = 1.0 / (im_sz ** 0.5)
    lim2 = 1.0 / (h_sz ** 0.5)
    out_sz = 2 * z_sz
    w1 = jax.random.uniform(k1, (im_sz, h_sz), dtype, -lim1, lim1)
    b1 = jax.random.uniform(k2, (1, h_sz), dtype, -lim1, lim1)
    w2 = jax.random.uniform(k3, (h_sz, out_sz), dtype, -lim2, lim2)
    b2 = jax.random.uniform(k4, (1, out_sz), dtype, -lim2, lim2)

    h_pad = _round_up(h_sz, lane_pad)
    out_pad = _round_up(out_sz, lane_pad)
    if h_pad != h_sz:
        w1 = jnp.pad(w1, ((0, 0), (0, h_pad - h_sz)))
        b1 = jnp.pad(b1, ((0, 0), (0, h_pad - h_sz)))
        w2 = jnp.pad(w2, ((0, h_pad - h_sz), (0, 0)))
    if out_pad != out_sz:
        w2 = jnp.pad(w2, ((0, 0), (0, out_pad - out_sz)))
        b2 = jnp.pad(b2, ((0, 0), (0, out_pad - out_sz)))

    # Cache bf16 weights once; biases stay f32 for the epilogue.
    return (w1.astype(jnp.bfloat16), b1.astype(jnp.float32),
            w2.astype(jnp.bfloat16), b2.astype(jnp.float32))


if __name__ == "__main__":
    key = jax.random.PRNGKey(0)
    kx, kp = jax.random.split(key)

    B, z_sz, h_sz, im_sz = 8, 10, 400, 784
    out_sz = 2 * z_sz
    x = jax.random.normal(kx, (B, im_sz), jnp.float32)
    w1, b1, w2, b2 = init_params(kp, z_sz=z_sz, h_sz=h_sz, im_sz=im_sz)

    out = fc_encoder(x, w1, b1, w2, b2, out_sz=out_sz)
    out = jax.block_until_ready(out)
    assert out.shape == (B, out_sz)

    # Reference 1: mirror the kernel's bf16-matmul / f32-accumulate path.
    h_bf = jnp.dot(x.astype(jnp.bfloat16), w1,
                   preferred_element_type=jnp.float32) + b1
    h_bf = jnp.where(h_bf > 0, h_bf, 0.2 * h_bf)
    ref_bf = jnp.dot(h_bf.astype(jnp.bfloat16), w2,
                     preferred_element_type=jnp.float32) + b2
    assert jnp.allclose(out, ref_bf[:, :out_sz], atol=1e-2, rtol=1e-2)

    # Reference 2: full-f32 PyTorch-equivalent forward (looser tolerance to
    # account for the in-kernel bf16 casts).
    w1_f, w2_f = w1.astype(jnp.float32), w2.astype(jnp.float32)
    h_f32 = x @ w1_f + b1
    h_f32 = jnp.where(h_f32 > 0, h_f32, 0.2 * h_f32)
    ref_f32 = h_f32 @ w2_f + b2
    assert jnp.allclose(out, ref_f32[:, :out_sz], atol=5e-2, rtol=5e-2)

    print("KERNEL_OK")
</pallas_src>

<mosaic_0001>
module attributes {stable_mosaic.version = 11 : i64} {
  func.func @fc_encoder_kernel(%arg0: i32, %arg1: memref<16x784xf32, #tpu.memory_space<vmem>>, %arg2: memref<784x512xbf16, #tpu.memory_space<vmem>>, %arg3: memref<1x512xf32, #tpu.memory_space<vmem>>, %arg4: memref<512x128xbf16, #tpu.memory_space<vmem>>, %arg5: memref<1x128xf32, #tpu.memory_space<vmem>>, %arg6: memref<16x128xf32, #tpu.memory_space<vmem>>) attributes {dimension_semantics = [#tpu.dimension_semantics<parallel>], iteration_bounds = array<i64: 1>, scalar_prefetch = 0 : i64, scratch_operands = 0 : i64, tpu.core_type = #tpu.core_type<tc>, window_params = [{transform_indices = @transform_0, window_bounds = array<i64: 16, 784>}, {pipeline_mode = #tpu.pipeline_mode<synchronous>, transform_indices = @transform_1, window_bounds = array<i64: 784, 512>}, {pipeline_mode = #tpu.pipeline_mode<synchronous>, transform_indices = @transform_2, window_bounds = array<i64: 1, 512>}, {pipeline_mode = #tpu.pipeline_mode<synchronous>, transform_indices = @transform_3, window_bounds = array<i64: 512, 128>}, {pipeline_mode = #tpu.pipeline_mode<synchronous>, transform_indices = @transform_4, window_bounds = array<i64: 1, 128>}, {transform_indices = @transform_5, window_bounds = array<i64: 16, 128>}]} {
    %c0 = arith.constant 0 : index
    %c0_0 = arith.constant 0 : index
    %0 = vector.load %arg1[%c0, %c0_0] : memref<16x784xf32, #tpu.memory_space<vmem>>, vector<16x784xf32>
    %1 = arith.truncf %0 : vector<16x784xf32> to vector<16x784xbf16>
    %c0_1 = arith.constant 0 : index
    %c0_2 = arith.constant 0 : index
    %2 = vector.load %arg2[%c0_1, %c0_2] : memref<784x512xbf16, #tpu.memory_space<vmem>>, vector<784x512xbf16>
    %cst = arith.constant dense<0.000000e+00> : vector<16x512xf32>
    %3 = tpu.matmul %1, %2, %cst {dimension_numbers = #tpu.dot_dimension_numbers<[1], [0], [0], [1], [0, 0, 1, 1], [], []>} : vector<16x784xbf16>, vector<784x512xbf16>, vector<16x512xf32> -> vector<16x512xf32>
    %c0_3 = arith.constant 0 : index
    %c0_4 = arith.constant 0 : index
    %4 = vector.load %arg3[%c0_3, %c0_4] : memref<1x512xf32, #tpu.memory_space<vmem>>, vector<1x512xf32>
    %5 = vector.broadcast %4 : vector<1x512xf32> to vector<16x512xf32>
    %6 = arith.addf %3, %5 : vector<16x512xf32>
    %cst_5 = arith.constant 0.000000e+00 : f32
    %7 = vector.broadcast %cst_5 : f32 to vector<16x512xf32>
    %8 = arith.cmpf ogt, %6, %7 : vector<16x512xf32>
    %cst_6 = arith.constant 2.000000e-01 : f32
    %9 = vector.broadcast %cst_6 : f32 to vector<16x512xf32>
    %10 = arith.mulf %9, %6 : vector<16x512xf32>
    %11 = arith.select %8, %6, %10 : vector<16x512xi1>, vector<16x512xf32>
    %12 = arith.truncf %11 : vector<16x512xf32> to vector<16x512xbf16>
    %c0_7 = arith.constant 0 : index
    %c0_8 = arith.constant 0 : index
    %13 = vector.load %arg4[%c0_7, %c0_8] : memref<512x128xbf16, #tpu.memory_space<vmem>>, vector<512x128xbf16>
    %cst_9 = arith.constant dense<0.000000e+00> : vector<16x128xf32>
    %14 = tpu.matmul %12, %13, %cst_9 {dimension_numbers = #tpu.dot_dimension_numbers<[1], [0], [0], [1], [0, 0, 1, 1], [], []>} : vector<16x512xbf16>, vector<512x128xbf16>, vector<16x128xf32> -> vector<16x128xf32>
    %c0_10 = arith.constant 0 : index
    %c0_11 = arith.constant 0 : index
    %15 = vector.load %arg5[%c0_10, %c0_11] : memref<1x128xf32, #tpu.memory_space<vmem>>, vector<1x128xf32>
    %16 = vector.broadcast %15 : vector<1x128xf32> to vector<16x128xf32>
    %17 = arith.addf %14, %16 : vector<16x128xf32>
    %c0_12 = arith.constant 0 : index
    %c0_13 = arith.constant 0 : index
    %18 = vector.load %arg6[%c0_12, %c0_13] : memref<16x128xf32, #tpu.memory_space<vmem>>, vector<16x128xf32>
    tpu.vector_store %arg6[%c0_12, %c0_13], %17 {strides = array<i32>} : memref<16x128xf32, #tpu.memory_space<vmem>>, vector<16x128xf32>,
    return
  }
  func.func @transform_0(%arg0: i32) -> (i32, i32) {
    %c0_i32 = arith.constant 0 : i32
    %c0_i32_0 = arith.constant 0 : i32
    return %arg0, %c0_i32 : i32, i32
  }
  func.func @transform_1(%arg0: i32) -> (i32, i32) {
    %c0_i32 = arith.constant 0 : i32
    %c0_i32_0 = arith.constant 0 : i32
    %c0_i32_1 = arith.constant 0 : i32
    return %c0_i32, %c0_i32_0 : i32, i32
  }
  func.func @transform_2(%arg0: i32) -> (i32, i32) {
    %c0_i32 = arith.constant 0 : i32
    %c0_i32_0 = arith.constant 0 : i32
    %c0_i32_1 = arith.constant 0 : i32
    return %c0_i32, %c0_i32_0 : i32, i32
  }
  func.func @transform_3(%arg0: i32) -> (i32, i32) {
    %c0_i32 = arith.constant 0 : i32
    %c0_i32_0 = arith.constant 0 : i32
    %c0_i32_1 = arith.constant 0 : i32
    return %c0_i32, %c0_i32_0 : i32, i32
  }
  func.func @transform_4(%arg0: i32) -> (i32, i32) {
    %c0_i32 = arith.constant 0 : i32
    %c0_i32_0 = arith.constant 0 : i32
    %c0_i32_1 = arith.constant 0 : i32
    return %c0_i32, %c0_i32_0 : i32, i32
  }
  func.func @transform_5(%arg0: i32) -> (i32, i32) {
    %c0_i32 = arith.constant 0 : i32
    %c0_i32_0 = arith.constant 0 : i32
    return %arg0, %c0_i32 : i32, i32
  }
}

</mosaic_0001>

<llo_original>
// kernel: tpu_custom_call.1
$region0: #{tpu_custom_call.1}
  #allocation0 [shape = 'u32[]', space=smem, size = 0x4, offset = 0x4, fixed_abs, tag = 'smem constant byte address 0x4 - core index']
  #allocation1 [shape = 'u32[144,128]{1,0:T(1,128)}', space=vmem, size = 0x12000, scoped, tag = 'internal scratch']
  %s0 = inlined_call_operand.hbm [shape: f32[8,784], index: 0, kind: input, shape index: {}]
  %s1 = inlined_call_operand.hbm [shape: bf16[784,512], index: 1, kind: input, shape index: {}]
  %s2 = inlined_call_operand.vmem [shape: f32[1,512], index: 2, kind: input, shape index: {}]
  %s3 = inlined_call_operand.hbm [shape: bf16[512,128], index: 3, kind: input, shape index: {}]
  %s4 = inlined_call_operand.vmem [shape: f32[1,128], index: 4, kind: input, shape index: {}]
  %s5 = inlined_call_operand.hbm [shape: f32[8,128], index: 5, kind: output, shape index: {}]
  %s6 = sld [smem:[#allocation0]]
  $region42: #{tpu_custom_call.1} parent=0
    _
  %s8 = ssub.s32 1, %s6
  %s9 = scalar_select 0, %s8, %s6
  $region1: #{tpu_custom_call.1} parent=0
    #allocation2 [shape = 'u8[57344]{0}', space=vmem, size = 0xe000, scoped, tag = 'input window, operand 0, single buffered']
    #allocation3 [shape = 's32[1]{0}', space=sflag, size = 0x4, scoped, tag = 'scoped memory for tpu_custom_call.1']
    #allocation4 [shape = 's32[1]{0}', space=sflag, size = 0x4, scoped, tag = 'scoped memory for tpu_custom_call.1']
    #allocation5 [shape = 'u8[802816]{0}', space=vmem, size = 0xc4000, scoped, tag = 'input window, operand 1, single buffered']
    #allocation6 [shape = 's32[1]{0}', space=sflag, size = 0x4, scoped, tag = 'scoped memory for tpu_custom_call.1']
    #allocation7 [shape = 'u8[131072]{0}', space=vmem, size = 0x20000, scoped, tag = 'input window, operand 3, single buffered']
    #allocation8 [shape = 'u8[8192]{0}', space=vmem, size = 0x2000, scoped, tag = 'output window, operand 0, single buffered']
    %10 = vsyncpa [#allocation3], 0
    %11 = vsyncpa [#allocation6], 0
    %12 = vsyncpa [#allocation4], 0
    // Predicated region
    $region2: #{tpu_custom_call.1} parent=1 // pred_check
      _
    $region3: #{tpu_custom_call.1} parent=1 // pred_check_branch
      %14 = sbr.rel (0) target = $region5
    $region4: #{tpu_custom_call.1} parent=1 // pred_region
      %s16 = ssub.s32 1792, 896
      %17 = vsyncadd [#allocation3], %s16
      %s18 = sshll.u32 [#allocation2], 4
      %s19 = int_to_ptr.vmem [resolvable:$true] %s18
      %24 = dma.hbm_to_vmem [thread:$0]  %s0, 896, %s19, [#allocation3], 896, 896, 56
    $region5: #{tpu_custom_call.1} parent=1 // pred_fallthru
      _
    // Predicated region
    $region6: #{tpu_custom_call.1} parent=1 // pred_check
      _
    $region7: #{tpu_custom_call.1} parent=1 // pred_check_branch
      %26 = sbr.rel (0) target = $region9
    $region8: #{tpu_custom_call.1} parent=1 // pred_region
      %s28 = ssub.s32 25088, 25088
      %29 = vsyncadd [#allocation6], %s28
      %s30 = sshll.u32 [#allocation5], 4
      %s31 = int_to_ptr.vmem [resolvable:$true] %s30
      %36 = dma.hbm_to_vmem [thread:$0]  %s1, 25088, %s31, [#allocation6], 256, 256, 16
    $region9: #{tpu_custom_call.1} parent=1 // pred_fallthru
      _
    // Predicated region
    $region10: #{tpu_custom_call.1} parent=1 // pred_check
      _
    $region11: #{tpu_custom_call.1} parent=1 // pred_check_branch
      %38 = sbr.rel (0) target = $region13
    $region12: #{tpu_custom_call.1} parent=1 // pred_region
      _
    $region13: #{tpu_custom_call.1} parent=1 // pred_fallthru
      _
    // Predicated region
    $region14: #{tpu_custom_call.1} parent=1 // pred_check
      _
    $region15: #{tpu_custom_call.1} parent=1 // pred_check_branch
      %40 = sbr.rel (0) target = $region17
    $region16: #{tpu_custom_call.1} parent=1 // pred_region
      %s42 = ssub.s32 4096, 4096
      %43 = vsyncadd [#allocation6], %s42
      %s44 = sshll.u32 [#allocation7], 4
      %s45 = int_to_ptr.vmem [resolvable:$true] %s44
      %50 = dma.hbm_to_vmem [thread:$0]  %s3, 4096, %s45, [#allocation6], 64, 64, 4
    $region17: #{tpu_custom_call.1} parent=1 // pred_fallthru
      _
    // Predicated region
    $region18: #{tpu_custom_call.1} parent=1 // pred_check
      _
    $region19: #{tpu_custom_call.1} parent=1 // pred_check_branch
      %52 = sbr.rel (0) target = $region21
    $region20: #{tpu_custom_call.1} parent=1 // pred_region
      _
    $region21: #{tpu_custom_call.1} parent=1 // pred_fallthru
      _
    // Predicated region
    $region22: #{tpu_custom_call.1} parent=1 // pred_check
      _
    $region23: #{tpu_custom_call.1} parent=1 // pred_check_branch
      %54 = sbr.rel (0) target = $region25
    $region24: #{tpu_custom_call.1} parent=1 // pred_region
      %55 = dma.done [#allocation3], 1792
    $region25: #{tpu_custom_call.1} parent=1 // pred_fallthru
      _
    // Predicated region
    $region26: #{tpu_custom_call.1} parent=1 // pred_check
      _
    $region27: #{tpu_custom_call.1} parent=1 // pred_check_branch
      %57 = sbr.rel (0) target = $region29
    $region28: #{tpu_custom_call.1} parent=1 // pred_region
      %58 = dma.done [#allocation6], 25088
    $region29: #{tpu_custom_call.1} parent=1 // pred_fallthru
      _
    // Predicated region
    $region30: #{tpu_custom_call.1} parent=1 // pred_check
      _
    $region31: #{tpu_custom_call.1} parent=1 // pred_check_branch
      %60 = sbr.rel (0) target = $region33
    $region32: #{tpu_custom_call.1} parent=1 // pred_region
      %61 = dma.done [#allocation6], 4096
    $region33: #{tpu_custom_call.1} parent=1 // pred_fallthru
      _
    %v63 = vld [vmem:[#allocation2] sm:$0xff]
    %v64 = vld [vmem:[#allocation2 + $0x8] sm:$0xff]
    %v65 = vld [vmem:[#allocation2 + $0x10] sm:$0xff]
    %v66 = vld [vmem:[#allocation2 + $0x18] sm:$0xff]
    %v67 = vld [vmem:[#allocation2 + $0x20] sm:$0xff]
    %v68 = vld [vmem:[#allocation2 + $0x28] sm:$0xff]
    %v69 = vld [vmem:[#allocation2 + $0x30] sm:$0xff]
    %v70 = vld [vmem:[#allocation2 + $0x38] sm:$0xff]
    %v71 = vld [vmem:[#allocation2 + $0x40] sm:$0xff]
    %v72 = vld [vmem:[#allocation2 + $0x48] sm:$0xff]
    %v73 = vld [vmem:[#allocation2 + $0x50] sm:$0xff]
    %v74 = vld [vmem:[#allocation2 + $0x58] sm:$0xff]
    %v75 = vld [vmem:[#allocation2 + $0x60] sm:$0xff]
    %v76 = vld [vmem:[#allocation2 + $0x68] sm:$0xff]
    %v77 = vpack.c.bf16 %v70, %v63
    %v78 = vpack.c.bf16 %v71, %v64
    %v79 = vpack.c.bf16 %v72, %v65
    %v80 = vpack.c.bf16 %v73, %v66
    %v81 = vpack.c.bf16 %v74, %v67
    %v82 = vpack.c.bf16 %v75, %v68
    %v83 = vpack.c.bf16 %v76, %v69
    %v84 = vld [vmem:[#allocation5] sm:$0xff]
    %v85 = vld [vmem:[#allocation5 + $0x8] sm:$0xff]
    %v86 = vld [vmem:[#allocation5 + $0x10] sm:$0xff]
    %v87 = vld [vmem:[#allocation5 + $0x18] sm:$0xff]
    %v88 = vld [vmem:[#allocation5 + $0x20] sm:$0xff]
    %v89 = vld [vmem:[#allocation5 + $0x28] sm:$0xff]
    %v90 = vld [vmem:[#allocation5 + $0x30] sm:$0xff]
    %v91 = vld [vmem:[#allocation5 + $0x38] sm:$0xff]
    %v92 = vld [vmem:[#allocation5 + $0x40] sm:$0xff]
    %v93 = vld [vmem:[#allocation5 + $0x48] sm:$0xff]
    %v94 = vld [vmem:[#allocation5 + $0x50] sm:$0xff]
    %v95 = vld [vmem:[#allocation5 + $0x58] sm:$0xff]
    %v96 = vld [vmem:[#allocation5 + $0x60] sm:$0xff]
    %v97 = vld [vmem:[#allocation5 + $0x68] sm:$0xff]
    %v98 = vld [vmem:[#allocation5 + $0x70] sm:$0xff]
    %v99 = vld [vmem:[#allocation5 + $0x78] sm:$0xff]
    %v100 = vld [vmem:[#allocation5 + $0x80] sm:$0xff]
    %v101 = vld [vmem:[#allocation5 + $0x88] sm:$0xff]
    %v102 = vld [vmem:[#allocation5 + $0x90] sm:$0xff]
    %v103 = vld [vmem:[#allocation5 + $0x98] sm:$0xff]
    %v104 = vld [vmem:[#allocation5 + $0xa0] sm:$0xff]
    %v105 = vld [vmem:[#allocation5 + $0xa8] sm:$0xff]
    %v106 = vld [vmem:[#allocation5 + $0xb0] sm:$0xff]
    %v107 = vld [vmem:[#allocation5 + $0xb8] sm:$0xff]
    %v108 = vld [vmem:[#allocation5 + $0xc0] sm:$0xff]
    %v109 = vld [vmem:[#allocation5 + $0xc8] sm:$0xff]
    %v110 = vld [vmem:[#allocation5 + $0xd0] sm:$0xff]
    %v111 = vld [vmem:[#allocation5 + $0xd8] sm:$0xff]
    %v112 = vld [vmem:[#allocation5 + $0xe0] sm:$0xff]
    %v113 = vld [vmem:[#allocation5 + $0xe8] sm:$0xff]
    %v114 = vld [vmem:[#allocation5 + $0xf0] sm:$0xff]
    %v115 = vld [vmem:[#allocation5 + $0xf8] sm:$0xff]
    %v116 = vld [vmem:[#allocation5 + $0x100] sm:$0xff]
    %v117 = vld [vmem:[#allocation5 + $0x108] sm:$0xff]
    %v118 = vld [vmem:[#allocation5 + $0x110] sm:$0xff]
    %v119 = vld [vmem:[#allocation5 + $0x118] sm:$0xff]
    %v120 = vld [vmem:[#allocation5 + $0x120] sm:$0xff]
    %v121 = vld [vmem:[#allocation5 + $0x128] sm:$0xff]
    %v122 = vld [vmem:[#allocation5 + $0x130] sm:$0xff]
    %v123 = vld [vmem:[#allocation5 + $0x138] sm:$0xff]
    %v124 = vld [vmem:[#allocation5 + $0x140] sm:$0xff]
    %v125 = vld [vmem:[#allocation5 + $0x148] sm:$0xff]
    %v126 = vld [vmem:[#allocation5 + $0x150] sm:$0xff]
    %v127 = vld [vmem:[#allocation5 + $0x158] sm:$0xff]
    %v128 = vld [vmem:[#allocation5 + $0x160] sm:$0xff]
    %v129 = vld [vmem:[#allocation5 + $0x168] sm:$0xff]
    %v130 = vld [vmem:[#allocation5 + $0x170] sm:$0xff]
    %v131 = vld [vmem:[#allocation5 + $0x178] sm:$0xff]
    %v132 = vld [vmem:[#allocation5 + $0x180] sm:$0xff]
    %v133 = vld [vmem:[#allocation5 + $0x188] sm:$0xff]
    %v134 = vld [vmem:[#allocation5 + $0x190] sm:$0xff]
    %v135 = vld [vmem:[#allocation5 + $0x198] sm:$0xff]
    %v136 = vld [vmem:[#allocation5 + $0x1a0] sm:$0xff]
    %v137 = vld [vmem:[#allocation5 + $0x1a8] sm:$0xff]
    %v138 = vld [vmem:[#allocation5 + $0x1b0] sm:$0xff]
    %v139 = vld [vmem:[#allocation5 + $0x1b8] sm:$0xff]
    %v140 = vld [vmem:[#allocation5 + $0x1c0] sm:$0xff]
    %v141 = vld [vmem:[#allocation5 + $0x1c8] sm:$0xff]
    %v142 = vld [vmem:[#allocation5 + $0x1d0] sm:$0xff]
    %v143 = vld [vmem:[#allocation5 + $0x1d8] sm:$0xff]
    %v144 = vld [vmem:[#allocation5 + $0x1e0] sm:$0xff]
    %v145 = vld [vmem:[#allocation5 + $0x1e8] sm:$0xff]
    %v146 = vld [vmem:[#allocation5 + $0x1f0] sm:$0xff]
    %v147 = vld [vmem:[#allocation5 + $0x1f8] sm:$0xff]
    %v148 = vld [vmem:[#allocation5 + $0x200] sm:$0xff]
    %v149 = vld [vmem:[#allocation5 + $0x208] sm:$0xff]
    %v150 = vld [vmem:[#allocation5 + $0x210] sm:$0xff]
    %v151 = vld [vmem:[#allocation5 + $0x218] sm:$0xff]
    %v152 = vld [vmem:[#allocation5 + $0x220] sm:$0xff]
    %v153 = vld [vmem:[#allocation5 + $0x228] sm:$0xff]
    %v154 = vld [vmem:[#allocation5 + $0x230] sm:$0xff]
    %v155 = vld [vmem:[#allocation5 + $0x238] sm:$0xff]
    %v156 = vld [vmem:[#allocation5 + $0x240] sm:$0xff]
    %v157 = vld [vmem:[#allocation5 + $0x248] sm:$0xff]
    %v158 = vld [vmem:[#allocation5 + $0x250] sm:$0xff]
    %v159 = vld [vmem:[#allocation5 + $0x258] sm:$0xff]
    %v160 = vld [vmem:[#allocation5 + $0x260] sm:$0xff]
    %v161 = vld [vmem:[#allocation5 + $0x268] sm:$0xff]
    %v162 = vld [vmem:[#allocation5 + $0x270] sm:$0xff]
    %v163 = vld [vmem:[#allocation5 + $0x278] sm:$0xff]
    %v164 = vld [vmem:[#allocation5 + $0x280] sm:$0xff]
    %v165 = vld [vmem:[#allocation5 + $0x288] sm:$0xff]
    %v166 = vld [vmem:[#allocation5 + $0x290] sm:$0xff]
    %v167 = vld [vmem:[#allocation5 + $0x298] sm:$0xff]
    %v168 = vld [vmem:[#allocation5 + $0x2a0] sm:$0xff]
    %v169 = vld [vmem:[#allocation5 + $0x2a8] sm:$0xff]
    %v170 = vld [vmem:[#allocation5 + $0x2b0] sm:$0xff]
    %v171 = vld [vmem:[#allocation5 + $0x2b8] sm:$0xff]
    %v172 = vld [vmem:[#allocation5 + $0x2c0] sm:$0xff]
    %v173 = vld [vmem:[#allocation5 + $0x2c8] sm:$0xff]
    %v174 = vld [vmem:[#allocation5 + $0x2d0] sm:$0xff]
    %v175 = vld [vmem:[#allocation5 + $0x2d8] sm:$0xff]
    %v176 = vld [vmem:[#allocation5 + $0x2e0] sm:$0xff]
    %v177 = vld [vmem:[#allocation5 + $0x2e8] sm:$0xff]
    %v178 = vld [vmem:[#allocation5 + $0x2f0] sm:$0xff]
    %v179 = vld [vmem:[#allocation5 + $0x2f8] sm:$0xff]
    %v180 = vld [vmem:[#allocation5 + $0x300] sm:$0xff]
    %v181 = vld [vmem:[#allocation5 + $0x308] sm:$0xff]
    %v182 = vld [vmem:[#allocation5 + $0x310] sm:$0xff]
    %v183 = vld [vmem:[#allocation5 + $0x318] sm:$0xff]
    %v184 = vld [vmem:[#allocation5 + $0x320] sm:$0xff]
    %v185 = vld [vmem:[#allocation5 + $0x328] sm:$0xff]
    %v186 = vld [vmem:[#allocation5 + $0x330] sm:$0xff]
    %v187 = vld [vmem:[#allocation5 + $0x338] sm:$0xff]
    %v188 = vld [vmem:[#allocation5 + $0x340] sm:$0xff]
    %v189 = vld [vmem:[#allocation5 + $0x348] sm:$0xff]
    %v190 = vld [vmem:[#allocation5 + $0x350] sm:$0xff]
    %v191 = vld [vmem:[#allocation5 + $0x358] sm:$0xff]
    %v192 = vld [vmem:[#allocation5 + $0x360] sm:$0xff]
    %v193 = vld [vmem:[#allocation5 + $0x368] sm:$0xff]
    %v194 = vld [vmem:[#allocation5 + $0x370] sm:$0xff]
    %v195 = vld [vmem:[#allocation5 + $0x378] sm:$0xff]
    %v196 = vld [vmem:[#allocation5 + $0x380] sm:$0xff]
    %v197 = vld [vmem:[#allocation5 + $0x388] sm:$0xff]
    %v198 = vld [vmem:[#allocation5 + $0x390] sm:$0xff]
    %v199 = vld [vmem:[#allocation5 + $0x398] sm:$0xff]
    %v200 = vld [vmem:[#allocation5 + $0x3a0] sm:$0xff]
    %v201 = vld [vmem:[#allocation5 + $0x3a8] sm:$0xff]
    %v202 = vld [vmem:[#allocation5 + $0x3b0] sm:$0xff]
    %v203 = vld [vmem:[#allocation5 + $0x3b8] sm:$0xff]
    %v204 = vld [vmem:[#allocation5 + $0x3c0] sm:$0xff]
    %v205 = vld [vmem:[#allocation5 + $0x3c8] sm:$0xff]
    %v206 = vld [vmem:[#allocation5 + $0x3d0] sm:$0xff]
    %v207 = vld [vmem:[#allocation5 + $0x3d8] sm:$0xff]
    %v208 = vld [vmem:[#allocation5 + $0x3e0] sm:$0xff]
    %v209 = vld [vmem:[#allocation5 + $0x3e8] sm:$0xff]
    %v210 = vld [vmem:[#allocation5 + $0x3f0] sm:$0xff]
    %v211 = vld [vmem:[#allocation5 + $0x3f8] sm:$0xff]
    %v212 = vld [vmem:[#allocation5 + $0x400] sm:$0xff]
    %v213 = vld [vmem:[#allocation5 + $0x408] sm:$0xff]
    %v214 = vld [vmem:[#allocation5 + $0x410] sm:$0xff]
    %v215 = vld [vmem:[#allocation5 + $0x418] sm:$0xff]
    %v216 = vld [vmem:[#allocation5 + $0x420] sm:$0xff]
    %v217 = vld [vmem:[#allocation5 + $0x428] sm:$0xff]
    %v218 = vld [vmem:[#allocation5 + $0x430] sm:$0xff]
    %v219 = vld [vmem:[#allocation5 + $0x438] sm:$0xff]
    %v220 = vld [vmem:[#allocation5 + $0x440] sm:$0xff]
    %v221 = vld [vmem:[#allocation5 + $0x448] sm:$0xff]
    %v222 = vld [vmem:[#allocation5 + $0x450] sm:$0xff]
    %v223 = vld [vmem:[#allocation5 + $0x458] sm:$0xff]
    %v224 = vld [vmem:[#allocation5 + $0x460] sm:$0xff]
    %v225 = vld [vmem:[#allocation5 + $0x468] sm:$0xff]
    %v226 = vld [vmem:[#allocation5 + $0x470] sm:$0xff]
    %v227 = vld [vmem:[#allocation5 + $0x478] sm:$0xff]
    %v228 = vld [vmem:[#allocation5 + $0x480] sm:$0xff]
    %v229 = vld [vmem:[#allocation5 + $0x488] sm:$0xff]
    %v230 = vld [vmem:[#allocation5 + $0x490] sm:$0xff]
    %v231 = vld [vmem:[#allocation5 + $0x498] sm:$0xff]
    %v232 = vld [vmem:[#allocation5 + $0x4a0] sm:$0xff]
    %v233 = vld [vmem:[#allocation5 + $0x4a8] sm:$0xff]
    %v234 = vld [vmem:[#allocation5 + $0x4b0] sm:$0xff]
    %v235 = vld [vmem:[#allocation5 + $0x4b8] sm:$0xff]
    %v236 = vld [vmem:[#allocation5 + $0x4c0] sm:$0xff]
    %v237 = vld [vmem:[#allocation5 + $0x4c8] sm:$0xff]
    %v238 = vld [vmem:[#allocation5 + $0x4d0] sm:$0xff]
    %v239 = vld [vmem:[#allocation5 + $0x4d8] sm:$0xff]
    %v240 = vld [vmem:[#allocation5 + $0x4e0] sm:$0xff]
    %v241 = vld [vmem:[#allocation5 + $0x4e8] sm:$0xff]
    %v242 = vld [vmem:[#allocation5 + $0x4f0] sm:$0xff]
    %v243 = vld [vmem:[#allocation5 + $0x4f8] sm:$0xff]
    %v244 = vld [vmem:[#allocation5 + $0x500] sm:$0xff]
    %v245 = vld [vmem:[#allocation5 + $0x508] sm:$0xff]
    %v246 = vld [vmem:[#allocation5 + $0x510] sm:$0xff]
    %v247 = vld [vmem:[#allocation5 + $0x518] sm:$0xff]
    %v248 = vld [vmem:[#allocation5 + $0x520] sm:$0xff]
    %v249 = vld [vmem:[#allocation5 + $0x528] sm:$0xff]
    %v250 = vld [vmem:[#allocation5 + $0x530] sm:$0xff]
    %v251 = vld [vmem:[#allocation5 + $0x538] sm:$0xff]
    %v252 = vld [vmem:[#allocation5 + $0x540] sm:$0xff]
    %v253 = vld [vmem:[#allocation5 + $0x548] sm:$0xff]
    %v254 = vld [vmem:[#allocation5 + $0x550] sm:$0xff]
    %v255 = vld [vmem:[#allocation5 + $0x558] sm:$0xff]
    %v256 = vld [vmem:[#allocation5 + $0x560] sm:$0xff]
    %v257 = vld [vmem:[#allocation5 + $0x568] sm:$0xff]
    %v258 = vld [vmem:[#allocation5 + $0x570] sm:$0xff]
    %v259 = vld [vmem:[#allocation5 + $0x578] sm:$0xff]
    %v260 = vld [vmem:[#allocation5 + $0x580] sm:$0xff]
    %v261 = vld [vmem:[#allocation5 + $0x588] sm:$0xff]
    %v262 = vld [vmem:[#allocation5 + $0x590] sm:$0xff]
    %v263 = vld [vmem:[#allocation5 + $0x598] sm:$0xff]
    %v264 = vld [vmem:[#allocation5 + $0x5a0] sm:$0xff]
    %v265 = vld [vmem:[#allocation5 + $0x5a8] sm:$0xff]
    %v266 = vld [vmem:[#allocation5 + $0x5b0] sm:$0xff]
    %v267 = vld [vmem:[#allocation5 + $0x5b8] sm:$0xff]
    %v268 = vld [vmem:[#allocation5 + $0x5c0] sm:$0xff]
    %v269 = vld [vmem:[#allocation5 + $0x5c8] sm:$0xff]
    %v270 = vld [vmem:[#allocation5 + $0x5d0] sm:$0xff]
    %v271 = vld [vmem:[#allocation5 + $0x5d8] sm:$0xff]
    %v272 = vld [vmem:[#allocation5 + $0x5e0] sm:$0xff]
    %v273 = vld [vmem:[#allocation5 + $0x5e8] sm:$0xff]
    %v274 = vld [vmem:[#allocation5 + $0x5f0] sm:$0xff]
    %v275 = vld [vmem:[#allocation5 + $0x5f8] sm:$0xff]
    %v276 = vld [vmem:[#allocation5 + $0x600] sm:$0xff]
    %v277 = vld [vmem:[#allocation5 + $0x608] sm:$0xff]
    %v278 = vld [vmem:[#allocation5 + $0x610] sm:$0xff]
    %v279 = vld [vmem:[#allocation5 + $0x618] sm:$0xff]
    %v280 = vld [vmem:[%s2] sm:$0xf]
    %v282 = vlaneseq
    %v283 = vshrl.u32 %v282, 7
    %v284 = vsub.s32 0, %v283
    %v285 = vrot.slane %v280, %v284
    %v286 = vlaneseq
    %v287 = vshrl.u32 %v286, 7
    %v288 = vsub.s32 1, %v287
    %v289 = vrot.slane %v280, %v288
    %v290 = vlaneseq
    %v291 = vshrl.u32 %v290, 7
    %v292 = vsub.s32 2, %v291
    %v293 = vrot.slane %v280, %v292
    %v294 = vlaneseq
    %v295 = vshrl.u32 %v294, 7
    %v296 = vsub.s32 3, %v295
    %v297 = vrot.slane %v280, %v296
    %v498 = vunpack.c.l.b16 %v84
    %v499 = vunpack.c.h.b16 %v84
    %v500 = vunpack.c.l.b16 %v85
    %v501 = vunpack.c.h.b16 %v85
    %v502 = vunpack.c.l.b16 %v86
    %v503 = vunpack.c.h.b16 %v86
    %v504 = vunpack.c.l.b16 %v87
    %v505 = vunpack.c.h.b16 %v87
    %v506 = vunpack.c.l.b16 %v88
    %v507 = vunpack.c.h.b16 %v88
    %v508 = vunpack.c.l.b16 %v89
    %v509 = vunpack.c.h.b16 %v89
    %v510 = vunpack.c.l.b16 %v90
    %v511 = vunpack.c.h.b16 %v90
    %v512 = vunpack.c.l.b16 %v91
    %v513 = vunpack.c.h.b16 %v91
    %v514 = vunpack.c.l.b16 %v92
    %v515 = vunpack.c.h.b16 %v92
    %v516 = vunpack.c.l.b16 %v93
    %v517 = vunpack.c.h.b16 %v93
    %v518 = vunpack.c.l.b16 %v94
    %v519 = vunpack.c.h.b16 %v94
    %v520 = vunpack.c.l.b16 %v95
    %v521 = vunpack.c.h.b16 %v95
    %v522 = vunpack.c.l.b16 %v96
    %v523 = vunpack.c.h.b16 %v96
    %v524 = vunpack.c.l.b16 %v97
    %v525 = vunpack.c.h.b16 %v97
    %v526 = vunpack.c.l.b16 %v98
    %v527 = vunpack.c.h.b16 %v98
    %v528 = vunpack.c.l.b16 %v99
    %v529 = vunpack.c.h.b16 %v99
    %v530 = vunpack.c.l.b16 %v100
    %v531 = vunpack.c.h.b16 %v100
    %v532 = vunpack.c.l.b16 %v101
    %v533 = vunpack.c.h.b16 %v101
    %v534 = vunpack.c.l.b16 %v102
    %v535 = vunpack.c.h.b16 %v102
    %v536 = vunpack.c.l.b16 %v103
    %v537 = vunpack.c.h.b16 %v103
    %v538 = vunpack.c.l.b16 %v104
    %v539 = vunpack.c.h.b16 %v104
    %v540 = vunpack.c.l.b16 %v105
    %v541 = vunpack.c.h.b16 %v105
    %v542 = vunpack.c.l.b16 %v106
    %v543 = vunpack.c.h.b16 %v106
    %v544 = vunpack.c.l.b16 %v107
    %v545 = vunpack.c.h.b16 %v107
    %v546 = vunpack.c.l.b16 %v108
    %v547 = vunpack.c.h.b16 %v108
    %v548 = vunpack.c.l.b16 %v109
    %v549 = vunpack.c.h.b16 %v109
    %v550 = vunpack.c.l.b16 %v110
    %v551 = vunpack.c.h.b16 %v110
    %v552 = vunpack.c.l.b16 %v111
    %v553 = vunpack.c.h.b16 %v111
    %v554 = vunpack.c.l.b16 %v112
    %v555 = vunpack.c.h.b16 %v112
    %v556 = vunpack.c.l.b16 %v113
    %v557 = vunpack.c.h.b16 %v113
    %v558 = vunpack.c.l.b16 %v114
    %v559 = vunpack.c.h.b16 %v114
    %v560 = vunpack.c.l.b16 %v115
    %v561 = vunpack.c.h.b16 %v115
    %v562 = vunpack.c.l.b16 %v116
    %v563 = vunpack.c.h.b16 %v116
    %v564 = vunpack.c.l.b16 %v117
    %v565 = vunpack.c.h.b16 %v117
    %v566 = vunpack.c.l.b16 %v118
    %v567 = vunpack.c.h.b16 %v118
    %v568 = vunpack.c.l.b16 %v119
    %v569 = vunpack.c.h.b16 %v119
    %v570 = vunpack.c.l.b16 %v120
    %v571 = vunpack.c.h.b16 %v120
    %v572 = vunpack.c.l.b16 %v121
    %v573 = vunpack.c.h.b16 %v121
    %v574 = vunpack.c.l.b16 %v122
    %v575 = vunpack.c.h.b16 %v122
    %v576 = vunpack.c.l.b16 %v123
    %v577 = vunpack.c.h.b16 %v123
    %v578 = vunpack.c.l.b16 %v124
    %v579 = vunpack.c.h.b16 %v124
    %v580 = vunpack.c.l.b16 %v125
    %v581 = vunpack.c.h.b16 %v125
    %v582 = vunpack.c.l.b16 %v126
    %v583 = vunpack.c.h.b16 %v126
    %v584 = vunpack.c.l.b16 %v127
    %v585 = vunpack.c.h.b16 %v127
    %v586 = vunpack.c.l.b16 %v128
    %v587 = vunpack.c.h.b16 %v128
    %v588 = vunpack.c.l.b16 %v129
    %v589 = vunpack.c.h.b16 %v129
    %v590 = vunpack.c.l.b16 %v130
    %v591 = vunpack.c.h.b16 %v130
    %v592 = vunpack.c.l.b16 %v131
    %v593 = vunpack.c.h.b16 %v131
    %v594 = vunpack.c.l.b16 %v132
    %v595 = vunpack.c.h.b16 %v132
    %v596 = vunpack.c.l.b16 %v133
    %v597 = vunpack.c.h.b16 %v133
    %v598 = vunpack.c.l.b16 %v134
    %v599 = vunpack.c.h.b16 %v134
    %v600 = vunpack.c.l.b16 %v135
    %v601 = vunpack.c.h.b16 %v135
    %v602 = vunpack.c.l.b16 %v136
    %v603 = vunpack.c.h.b16 %v136
    %v604 = vunpack.c.l.b16 %v137
    %v605 = vunpack.c.h.b16 %v137
    %v606 = vunpack.c.l.b16 %v138
    %v607 = vunpack.c.h.b16 %v138
    %v608 = vunpack.c.l.b16 %v139
    %v609 = vunpack.c.h.b16 %v139
    %v610 = vunpack.c.l.b16 %v140
    %v611 = vunpack.c.h.b16 %v140
    %v612 = vunpack.c.l.b16 %v141
    %v613 = vunpack.c.h.b16 %v141
    %v614 = vunpack.c.l.b16 %v142
    %v615 = vunpack.c.h.b16 %v142
    %v616 = vunpack.c.l.b16 %v143
    %v617 = vunpack.c.h.b16 %v143
    %v618 = vunpack.c.l.b16 %v144
    %v619 = vunpack.c.h.b16 %v144
    %v620 = vunpack.c.l.b16 %v145
    %v621 = vunpack.c.h.b16 %v145
    %v622 = vunpack.c.l.b16 %v146
    %v623 = vunpack.c.h.b16 %v146
    %v624 = vunpack.c.l.b16 %v147
    %v625 = vunpack.c.h.b16 %v147
    %v626 = vunpack.c.l.b16 %v148
    %v627 = vunpack.c.h.b16 %v148
    %v628 = vunpack.c.l.b16 %v149
    %v629 = vunpack.c.h.b16 %v149
    %v630 = vunpack.c.l.b16 %v150
    %v631 = vunpack.c.h.b16 %v150
    %v632 = vunpack.c.l.b16 %v151
    %v633 = vunpack.c.h.b16 %v151
    %v634 = vunpack.c.l.b16 %v152
    %v635 = vunpack.c.h.b16 %v152
    %v636 = vunpack.c.l.b16 %v153
    %v637 = vunpack.c.h.b16 %v153
    %v638 = vunpack.c.l.b16 %v154
    %v639 = vunpack.c.h.b16 %v154
    %v640 = vunpack.c.l.b16 %v155
    %v641 = vunpack.c.h.b16 %v155
    %v642 = vunpack.c.l.b16 %v156
    %v643 = vunpack.c.h.b16 %v156
    %v644 = vunpack.c.l.b16 %v157
    %v645 = vunpack.c.h.b16 %v157
    %v646 = vunpack.c.l.b16 %v158
    %v647 = vunpack.c.h.b16 %v158
    %v648 = vunpack.c.l.b16 %v159
    %v649 = vunpack.c.h.b16 %v159
    %v650 = vunpack.c.l.b16 %v160
    %v651 = vunpack.c.h.b16 %v160
    %v652 = vunpack.c.l.b16 %v161
    %v653 = vunpack.c.h.b16 %v161
    %v654 = vunpack.c.l.b16 %v162
    %v655 = vunpack.c.h.b16 %v162
    %v656 = vunpack.c.l.b16 %v163
    %v657 = vunpack.c.h.b16 %v163
    %v658 = vunpack.c.l.b16 %v164
    %v659 = vunpack.c.h.b16 %v164
    %v660 = vunpack.c.l.b16 %v165
    %v661 = vunpack.c.h.b16 %v165
    %v662 = vunpack.c.l.b16 %v166
    %v663 = vunpack.c.h.b16 %v166
    %v664 = vunpack.c.l.b16 %v167
    %v665 = vunpack.c.h.b16 %v167
    %v666 = vunpack.c.l.b16 %v168
    %v667 = vunpack.c.h.b16 %v168
    %v668 = vunpack.c.l.b16 %v169
    %v669 = vunpack.c.h.b16 %v169
    %v670 = vunpack.c.l.b16 %v170
    %v671 = vunpack.c.h.b16 %v170
    %v672 = vunpack.c.l.b16 %v171
    %v673 = vunpack.c.h.b16 %v171
    %v674 = vunpack.c.l.b16 %v172
    %v675 = vunpack.c.h.b16 %v172
    %v676 = vunpack.c.l.b16 %v173
    %v677 = vunpack.c.h.b16 %v173
    %v678 = vunpack.c.l.b16 %v174
    %v679 = vunpack.c.h.b16 %v174
    %v680 = vunpack.c.l.b16 %v175
    %v681 = vunpack.c.h.b16 %v175
    %v682 = vunpack.c.l.b16 %v176
    %v683 = vunpack.c.h.b16 %v176
    %v684 = vunpack.c.l.b16 %v177
    %v685 = vunpack.c.h.b16 %v177
    %v686 = vunpack.c.l.b16 %v178
    %v687 = vunpack.c.h.b16 %v178
    %v688 = vunpack.c.l.b16 %v179
    %v689 = vunpack.c.h.b16 %v179
    %v690 = vunpack.c.l.b16 %v180
    %v691 = vunpack.c.h.b16 %v180
    %v692 = vunpack.c.l.b16 %v181
    %v693 = vunpack.c.h.b16 %v181
    %v694 = vunpack.c.l.b16 %v182
    %v695 = vunpack.c.h.b16 %v182
    %v696 = vunpack.c.l.b16 %v183
    %v697 = vunpack.c.h.b16 %v183
    %v698 = vunpack.c.l.b16 %v184
    %v699 = vunpack.c.h.b16 %v184
    %v700 = vunpack.c.l.b16 %v185
    %v701 = vunpack.c.h.b16 %v185
    %v702 = vunpack.c.l.b16 %v186
    %v703 = vunpack.c.h.b16 %v186
    %v704 = vunpack.c.l.b16 %v187
    %v705 = vunpack.c.h.b16 %v187
    %v706 = vunpack.c.l.b16 %v188
    %v707 = vunpack.c.h.b16 %v188
    %v708 = vunpack.c.l.b16 %v189
    %v709 = vunpack.c.h.b16 %v189
    %v710 = vunpack.c.l.b16 %v190
    %v711 = vunpack.c.h.b16 %v190
    %v712 = vunpack.c.l.b16 %v191
    %v713 = vunpack.c.h.b16 %v191
    %v714 = vunpack.c.l.b16 %v192
    %v715 = vunpack.c.h.b16 %v192
    %v716 = vunpack.c.l.b16 %v193
    %v717 = vunpack.c.h.b16 %v193
    %v718 = vunpack.c.l.b16 %v194
    %v719 = vunpack.c.h.b16 %v194
    %v720 = vunpack.c.l.b16 %v195
    %v721 = vunpack.c.h.b16 %v195
    %v722 = vunpack.c.l.b16 %v196
    %v723 = vunpack.c.h.b16 %v196
    %v724 = vunpack.c.l.b16 %v197
    %v725 = vunpack.c.h.b16 %v197
    %v726 = vunpack.c.l.b16 %v198
    %v727 = vunpack.c.h.b16 %v198
    %v728 = vunpack.c.l.b16 %v199
    %v729 = vunpack.c.h.b16 %v199
    %v730 = vunpack.c.l.b16 %v200
    %v731 = vunpack.c.h.b16 %v200
    %v732 = vunpack.c.l.b16 %v201
    %v733 = vunpack.c.h.b16 %v201
    %v734 = vunpack.c.l.b16 %v202
    %v735 = vunpack.c.h.b16 %v202
    %v736 = vunpack.c.l.b16 %v203
    %v737 = vunpack.c.h.b16 %v203
    %v738 = vunpack.c.l.b16 %v204
    %v739 = vunpack.c.h.b16 %v204
    %v740 = vunpack.c.l.b16 %v205
    %v741 = vunpack.c.h.b16 %v205
    %v742 = vunpack.c.l.b16 %v206
    %v743 = vunpack.c.h.b16 %v206
    %v744 = vunpack.c.l.b16 %v207
    %v745 = vunpack.c.h.b16 %v207
    %v746 = vunpack.c.l.b16 %v208
    %v747 = vunpack.c.h.b16 %v208
    %v748 = vunpack.c.l.b16 %v209
    %v749 = vunpack.c.h.b16 %v209
    %v750 = vunpack.c.l.b16 %v210
    %v751 = vunpack.c.h.b16 %v210
    %v752 = vunpack.c.l.b16 %v211
    %v753 = vunpack.c.h.b16 %v211
    %v754 = vunpack.c.l.b16 %v212
    %v755 = vunpack.c.h.b16 %v212
    %v756 = vunpack.c.l.b16 %v213
    %v757 = vunpack.c.h.b16 %v213
    %v758 = vunpack.c.l.b16 %v214
    %v759 = vunpack.c.h.b16 %v214
    %v760 = vunpack.c.l.b16 %v215
    %v761 = vunpack.c.h.b16 %v215
    %v762 = vunpack.c.l.b16 %v216
    %v763 = vunpack.c.h.b16 %v216
    %v764 = vunpack.c.l.b16 %v217
    %v765 = vunpack.c.h.b16 %v217
    %v766 = vunpack.c.l.b16 %v218
    %v767 = vunpack.c.h.b16 %v218
    %v768 = vunpack.c.l.b16 %v219
    %v769 = vunpack.c.h.b16 %v219
    %v770 = vunpack.c.l.b16 %v220
    %v771 = vunpack.c.h.b16 %v220
    %v772 = vunpack.c.l.b16 %v221
    %v773 = vunpack.c.h.b16 %v221
    %v774 = vunpack.c.l.b16 %v222
    %v775 = vunpack.c.h.b16 %v222
    %v776 = vunpack.c.l.b16 %v223
    %v777 = vunpack.c.h.b16 %v223
    %v778 = vunpack.c.l.b16 %v224
    %v779 = vunpack.c.h.b16 %v224
    %v780 = vunpack.c.l.b16 %v225
    %v781 = vunpack.c.h.b16 %v225
    %v782 = vunpack.c.l.b16 %v226
    %v783 = vunpack.c.h.b16 %v226
    %v784 = vunpack.c.l.b16 %v227
    %v785 = vunpack.c.h.b16 %v227
    %v786 = vunpack.c.l.b16 %v228
    %v787 = vunpack.c.h.b16 %v228
    %v788 = vunpack.c.l.b16 %v229
    %v789 = vunpack.c.h.b16 %v229
    %v790 = vunpack.c.l.b16 %v230
    %v791 = vunpack.c.h.b16 %v230
    %v792 = vunpack.c.l.b16 %v231
    %v793 = vunpack.c.h.b16 %v231
    %v794 = vunpack.c.l.b16 %v232
    %v795 = vunpack.c.h.b16 %v232
    %v796 = vunpack.c.l.b16 %v233
    %v797 = vunpack.c.h.b16 %v233
    %v798 = vunpack.c.l.b16 %v234
    %v799 = vunpack.c.h.b16 %v234
    %v800 = vunpack.c.l.b16 %v235
    %v801 = vunpack.c.h.b16 %v235
    %v802 = vunpack.c.l.b16 %v236
    %v803 = vunpack.c.h.b16 %v236
    %v804 = vunpack.c.l.b16 %v237
    %v805 = vunpack.c.h.b16 %v237
    %v806 = vunpack.c.l.b16 %v238
    %v807 = vunpack.c.h.b16 %v238
    %v808 = vunpack.c.l.b16 %v239
    %v809 = vunpack.c.h.b16 %v239
    %v810 = vunpack.c.l.b16 %v240
    %v811 = vunpack.c.h.b16 %v240
    %v812 = vunpack.c.l.b16 %v241
    %v813 = vunpack.c.h.b16 %v241
    %v814 = vunpack.c.l.b16 %v242
    %v815 = vunpack.c.h.b16 %v242
    %v816 = vunpack.c.l.b16 %v243
    %v817 = vunpack.c.h.b16 %v243
    %v818 = vunpack.c.l.b16 %v244
    %v819 = vunpack.c.h.b16 %v244
    %v820 = vunpack.c.l.b16 %v245
    %v821 = vunpack.c.h.b16 %v245
    %v822 = vunpack.c.l.b16 %v246
    %v823 = vunpack.c.h.b16 %v246
    %v824 = vunpack.c.l.b16 %v247
    %v825 = vunpack.c.h.b16 %v247
    %v826 = vunpack.c.l.b16 %v248
    %v827 = vunpack.c.h.b16 %v248
    %v828 = vunpack.c.l.b16 %v249
    %v829 = vunpack.c.h.b16 %v249
    %v830 = vunpack.c.l.b16 %v250
    %v831 = vunpack.c.h.b16 %v250
    %v832 = vunpack.c.l.b16 %v251
    %v833 = vunpack.c.h.b16 %v251
    %v834 = vunpack.c.l.b16 %v252
    %v835 = vunpack.c.h.b16 %v252
    %v836 = vunpack.c.l.b16 %v253
    %v837 = vunpack.c.h.b16 %v253
    %v838 = vunpack.c.l.b16 %v254
    %v839 = vunpack.c.h.b16 %v254
    %v840 = vunpack.c.l.b16 %v255
    %v841 = vunpack.c.h.b16 %v255
    %v842 = vunpack.c.l.b16 %v256
    %v843 = vunpack.c.h.b16 %v256
    %v844 = vunpack.c.l.b16 %v257
    %v845 = vunpack.c.h.b16 %v257
    %v846 = vunpack.c.l.b16 %v258
    %v847 = vunpack.c.h.b16 %v258
    %v848 = vunpack.c.l.b16 %v259
    %v849 = vunpack.c.h.b16 %v259
    %v850 = vunpack.c.l.b16 %v260
    %v851 = vunpack.c.h.b16 %v260
    %v852 = vunpack.c.l.b16 %v261
    %v853 = vunpack.c.h.b16 %v261
    %v854 = vunpack.c.l.b16 %v262
    %v855 = vunpack.c.h.b16 %v262
    %v856 = vunpack.c.l.b16 %v263
    %v857 = vunpack.c.h.b16 %v263
    %v858 = vunpack.c.l.b16 %v264
    %v859 = vunpack.c.h.b16 %v264
    %v860 = vunpack.c.l.b16 %v265
    %v861 = vunpack.c.h.b16 %v265
    %v862 = vunpack.c.l.b16 %v266
    %v863 = vunpack.c.h.b16 %v266
    %v864 = vunpack.c.l.b16 %v267
    %v865 = vunpack.c.h.b16 %v267
    %v866 = vunpack.c.l.b16 %v268
    %v867 = vunpack.c.h.b16 %v268
    %v868 = vunpack.c.l.b16 %v269
    %v869 = vunpack.c.h.b16 %v269
    %v870 = vunpack.c.l.b16 %v270
    %v871 = vunpack.c.h.b16 %v270
    %v872 = vunpack.c.l.b16 %v271
    %v873 = vunpack.c.h.b16 %v271
    %v874 = vunpack.c.l.b16 %v272
    %v875 = vunpack.c.h.b16 %v272
    %v876 = vunpack.c.l.b16 %v273
    %v877 = vunpack.c.h.b16 %v273
    %v878 = vunpack.c.l.b16 %v274
    %v879 = vunpack.c.h.b16 %v274
    %v880 = vunpack.c.l.b16 %v275
    %v881 = vunpack.c.h.b16 %v275
    %v882 = vunpack.c.l.b16 %v276
    %v883 = vunpack.c.h.b16 %v276
    %v884 = vunpack.c.l.b16 %v277
    %v885 = vunpack.c.h.b16 %v277
    %v886 = vunpack.c.l.b16 %v278
    %v887 = vunpack.c.h.b16 %v278
    %v888 = vunpack.c.l.b16 %v279
    %v889 = vunpack.c.h.b16 %v279
    %v890 = vpack.c.b16 %v502, %v498
    %v891 = vpack.c.b16 %v503, %v499
    %v892 = vpack.c.b16 %v504, %v500
    %v893 = vpack.c.b16 %v505, %v501
    %v894 = vpack.c.b16 %v510, %v506
    %v895 = vpack.c.b16 %v511, %v507
    %v896 = vpack.c.b16 %v512, %v508
    %v897 = vpack.c.b16 %v513, %v509
    %v898 = vpack.c.b16 %v518, %v514
    %v899 = vpack.c.b16 %v519, %v515
    %v900 = vpack.c.b16 %v520, %v516
    %v901 = vpack.c.b16 %v521, %v517
    %v902 = vpack.c.b16 %v526, %v522
    %v903 = vpack.c.b16 %v527, %v523
    %v904 = vpack.c.b16 %v528, %v524
    %v905 = vpack.c.b16 %v529, %v525
    %v906 = vpack.c.b16 %v534, %v530
    %v907 = vpack.c.b16 %v535, %v531
    %v908 = vpack.c.b16 %v536, %v532
    %v909 = vpack.c.b16 %v537, %v533
    %v910 = vpack.c.b16 %v542, %v538
    %v911 = vpack.c.b16 %v543, %v539
    %v912 = vpack.c.b16 %v544, %v540
    %v913 = vpack.c.b16 %v545, %v541
    %v914 = vpack.c.b16 %v550, %v546
    %v915 = vpack.c.b16 %v551, %v547
    %v916 = vpack.c.b16 %v552, %v548
    %v917 = vpack.c.b16 %v553, %v549
    %v918 = vpack.c.b16 %v558, %v554
    %v919 = vpack.c.b16 %v559, %v555
    %v920 = vpack.c.b16 %v560, %v556
    %v921 = vpack.c.b16 %v561, %v557
    %v922 = vpack.c.b16 %v566, %v562
    %v923 = vpack.c.b16 %v567, %v563
    %v924 = vpack.c.b16 %v568, %v564
    %v925 = vpack.c.b16 %v569, %v565
    %v926 = vpack.c.b16 %v574, %v570
    %v927 = vpack.c.b16 %v575, %v571
    %v928 = vpack.c.b16 %v576, %v572
    %v929 = vpack.c.b16 %v577, %v573
    %v930 = vpack.c.b16 %v582, %v578
    %v931 = vpack.c.b16 %v583, %v579
    %v932 = vpack.c.b16 %v584, %v580
    %v933 = vpack.c.b16 %v585, %v581
    %v934 = vpack.c.b16 %v590, %v586
    %v935 = vpack.c.b16 %v591, %v587
    %v936 = vpack.c.b16 %v592, %v588
    %v937 = vpack.c.b16 %v593, %v589
    %v938 = vpack.c.b16 %v598, %v594
    %v939 = vpack.c.b16 %v599, %v595
    %v940 = vpack.c.b16 %v600, %v596
    %v941 = vpack.c.b16 %v601, %v597
    %v942 = vpack.c.b16 %v606, %v602
    %v943 = vpack.c.b16 %v607, %v603
    %v944 = vpack.c.b16 %v608, %v604
    %v945 = vpack.c.b16 %v609, %v605
    %v946 = vpack.c.b16 %v614, %v610
    %v947 = vpack.c.b16 %v615, %v611
    %v948 = vpack.c.b16 %v616, %v612
    %v949 = vpack.c.b16 %v617, %v613
    %v950 = vpack.c.b16 %v622, %v618
    %v951 = vpack.c.b16 %v623, %v619
    %v952 = vpack.c.b16 %v624, %v620
    %v953 = vpack.c.b16 %v625, %v621
    %v954 = vpack.c.b16 %v630, %v626
    %v955 = vpack.c.b16 %v631, %v627
    %v956 = vpack.c.b16 %v632, %v628
    %v957 = vpack.c.b16 %v633, %v629
    %v958 = vpack.c.b16 %v638, %v634
    %v959 = vpack.c.b16 %v639, %v635
    %v960 = vpack.c.b16 %v640, %v636
    %v961 = vpack.c.b16 %v641, %v637
    %v962 = vpack.c.b16 %v646, %v642
    %v963 = vpack.c.b16 %v647, %v643
    %v964 = vpack.c.b16 %v648, %v644
    %v965 = vpack.c.b16 %v649, %v645
    %v966 = vpack.c.b16 %v654, %v650
    %v967 = vpack.c.b16 %v655, %v651
    %v968 = vpack.c.b16 %v656, %v652
    %v969 = vpack.c.b16 %v657, %v653
    %v970 = vpack.c.b16 %v662, %v658
    %v971 = vpack.c.b16 %v663, %v659
    %v972 = vpack.c.b16 %v664, %v660
    %v973 = vpack.c.b16 %v665, %v661
    %v974 = vpack.c.b16 %v670, %v666
    %v975 = vpack.c.b16 %v671, %v667
    %v976 = vpack.c.b16 %v672, %v668
    %v977 = vpack.c.b16 %v673, %v669
    %v978 = vpack.c.b16 %v678, %v674
    %v979 = vpack.c.b16 %v679, %v675
    %v980 = vpack.c.b16 %v680, %v676
    %v981 = vpack.c.b16 %v681, %v677
    %v982 = vpack.c.b16 %v686, %v682
    %v983 = vpack.c.b16 %v687, %v683
    %v984 = vpack.c.b16 %v688, %v684
    %v985 = vpack.c.b16 %v689, %v685
    %v986 = vpack.c.b16 %v694, %v690
    %v987 = vpack.c.b16 %v695, %v691
    %v988 = vpack.c.b16 %v696, %v692
    %v989 = vpack.c.b16 %v697, %v693
    %v990 = vpack.c.b16 %v702, %v698
    %v991 = vpack.c.b16 %v703, %v699
    %v992 = vpack.c.b16 %v704, %v700
    %v993 = vpack.c.b16 %v705, %v701
    %v994 = vpack.c.b16 %v710, %v706
    %v995 = vpack.c.b16 %v711, %v707
    %v996 = vpack.c.b16 %v712, %v708
    %v997 = vpack.c.b16 %v713, %v709
    %v998 = vpack.c.b16 %v718, %v714
    %v999 = vpack.c.b16 %v719, %v715
    %v1000 = vpack.c.b16 %v720, %v716
    %v1001 = vpack.c.b16 %v721, %v717
    %v1002 = vpack.c.b16 %v726, %v722
    %v1003 = vpack.c.b16 %v727, %v723
    %v1004 = vpack.c.b16 %v728, %v724
    %v1005 = vpack.c.b16 %v729, %v725
    %v1006 = vpack.c.b16 %v734, %v730
    %v1007 = vpack.c.b16 %v735, %v731
    %v1008 = vpack.c.b16 %v736, %v732
    %v1009 = vpack.c.b16 %v737, %v733
    %v1010 = vpack.c.b16 %v742, %v738
    %v1011 = vpack.c.b16 %v743, %v739
    %v1012 = vpack.c.b16 %v744, %v740
    %v1013 = vpack.c.b16 %v745, %v741
    %v1014 = vpack.c.b16 %v750, %v746
    %v1015 = vpack.c.b16 %v751, %v747
    %v1016 = vpack.c.b16 %v752, %v748
    %v1017 = vpack.c.b16 %v753, %v749
    %v1018 = vpack.c.b16 %v758, %v754
    %v1019 = vpack.c.b16 %v759, %v755
    %v1020 = vpack.c.b16 %v760, %v756
    %v1021 = vpack.c.b16 %v761, %v757
    %v1022 = vpack.c.b16 %v766, %v762
    %v1023 = vpack.c.b16 %v767, %v763
    %v1024 = vpack.c.b16 %v768, %v764
    %v1025 = vpack.c.b16 %v769, %v765
    %v1026 = vpack.c.b16 %v774, %v770
    %v1027 = vpack.c.b16 %v775, %v771
    %v1028 = vpack.c.b16 %v776, %v772
    %v1029 = vpack.c.b16 %v777, %v773
    %v1030 = vpack.c.b16 %v782, %v778
    %v1031 = vpack.c.b16 %v783, %v779
    %v1032 = vpack.c.b16 %v784, %v780
    %v1033 = vpack.c.b16 %v785, %v781
    %v1034 = vpack.c.b16 %v790, %v786
    %v1035 = vpack.c.b16 %v791, %v787
    %v1036 = vpack.c.b16 %v792, %v788
    %v1037 = vpack.c.b16 %v793, %v789
    %v1038 = vpack.c.b16 %v798, %v794
    %v1039 = vpack.c.b16 %v799, %v795
    %v1040 = vpack.c.b16 %v800, %v796
    %v1041 = vpack.c.b16 %v801, %v797
    %v1042 = vpack.c.b16 %v806, %v802
    %v1043 = vpack.c.b16 %v807, %v803
    %v1044 = vpack.c.b16 %v808, %v804
    %v1045 = vpack.c.b16 %v809, %v805
    %v1046 = vpack.c.b16 %v814, %v810
    %v1047 = vpack.c.b16 %v815, %v811
    %v1048 = vpack.c.b16 %v816, %v812
    %v1049 = vpack.c.b16 %v817, %v813
    %v1050 = vpack.c.b16 %v822, %v818
    %v1051 = vpack.c.b16 %v823, %v819
    %v1052 = vpack.c.b16 %v824, %v820
    %v1053 = vpack.c.b16 %v825, %v821
    %v1054 = vpack.c.b16 %v830, %v826
    %v1055 = vpack.c.b16 %v831, %v827
    %v1056 = vpack.c.b16 %v832, %v828
    %v1057 = vpack.c.b16 %v833, %v829
    %v1058 = vpack.c.b16 %v838, %v834
    %v1059 = vpack.c.b16 %v839, %v835
    %v1060 = vpack.c.b16 %v840, %v836
    %v1061 = vpack.c.b16 %v841, %v837
    %v1062 = vpack.c.b16 %v846, %v842
    %v1063 = vpack.c.b16 %v847, %v843
    %v1064 = vpack.c.b16 %v848, %v844
    %v1065 = vpack.c.b16 %v849, %v845
    %v1066 = vpack.c.b16 %v854, %v850
    %v1067 = vpack.c.b16 %v855, %v851
    %v1068 = vpack.c.b16 %v856, %v852
    %v1069 = vpack.c.b16 %v857, %v853
    %v1070 = vpack.c.b16 %v862, %v858
    %v1071 = vpack.c.b16 %v863, %v859
    %v1072 = vpack.c.b16 %v864, %v860
    %v1073 = vpack.c.b16 %v865, %v861
    %v1074 = vpack.c.b16 %v870, %v866
    %v1075 = vpack.c.b16 %v871, %v867
    %v1076 = vpack.c.b16 %v872, %v868
    %v1077 = vpack.c.b16 %v873, %v869
    %v1078 = vpack.c.b16 %v878, %v874
    %v1079 = vpack.c.b16 %v879, %v875
    %v1080 = vpack.c.b16 %v880, %v876
    %v1081 = vpack.c.b16 %v881, %v877
    %v1082 = vpack.c.b16 %v886, %v882
    %v1083 = vpack.c.b16 %v887, %v883
    %v1084 = vpack.c.b16 %v888, %v884
    %v1085 = vpack.c.b16 %v889, %v885
    %vm1282 = vcmask 130048
    %v1284 = vsel %vm1282, %v83, 0
    %1286 = vmatprep.subr.bf16.mxu0 %v891
    %1287 = vmatpush1.bf16.msra.mxu0 %v890
    %1288 = vmatprep.subr.bf16.mxu0 %v895
    %1289 = vmatpush1.bf16.msra.mxu0 %v894
    %1290 = vmatprep.subr.bf16.mxu0 %v899
    %1291 = vmatpush1.bf16.msra.mxu0 %v898
    %1292 = vmatprep.subr.bf16.mxu0 %v903
    %1293 = vmatpush1.bf16.msra.mxu0 %v902
    %1294 = vmatprep.subr.bf16.mxu0 %v907
    %1295 = vmatpush1.bf16.msra.mxu0 %v906
    %1296 = vmatprep.subr.bf16.mxu0 %v911
    %1297 = vmatpush1.bf16.msra.mxu0 %v910
    %1298 = vmatprep.subr.bf16.mxu0 %v915
    %1299 = vmatpush1.bf16.msra.mxu0 %v914
    %1300 = vmatprep.subr.bf16.mxu0 %v919
    %1301 = vmatpush1.bf16.msra.mxu0 %v918
    %1302 = vmatprep.subr.bf16.mxu0 %v923
    %1303 = vmatpush1.bf16.msra.mxu0 %v922
    %1304 = vmatprep.subr.bf16.mxu0 %v927
    %1305 = vmatpush1.bf16.msra.mxu0 %v926
    %1306 = vmatprep.subr.bf16.mxu0 %v931
    %1307 = vmatpush1.bf16.msra.mxu0 %v930
    %1308 = vmatprep.subr.bf16.mxu0 %v935
    %1309 = vmatpush1.bf16.msra.mxu0 %v934
    %1310 = vmatprep.subr.bf16.mxu0 %v939
    %1311 = vmatpush1.bf16.msra.mxu0 %v938
    %1312 = vmatprep.subr.bf16.mxu0 %v943
    %1313 = vmatpush1.bf16.msra.mxu0 %v942
    %1314 = vmatprep.subr.bf16.mxu0 %v947
    %1315 = vmatpush1.bf16.msra.mxu0 %v946
    %1316 = vmatprep.subr.bf16.mxu0 %v951
    %1317 = vmatpush1.bf16.msra.mxu0 %v950
    %1318 = vmatprep.mubr.bf16.mxu0 %v78
    %1319 = vmatmul.mubr.bf16.gmra.mrb[0].mxu0 %v77
    %v1320 = vpop.f32.mrb[0].mxu0
    %v1321 = vadd.f32 %v285, %v1320
    %v1322 = vpop.f32.mrb[0].mxu0
    %v1323 = vadd.f32 %v289, %v1322
    %v1324 = vpop.f32.mrb[0].mxu0
    %v1325 = vadd.f32 %v285, %v1324
    %v1326 = vpop.f32.mrb[0].mxu0
    %v1327 = vadd.f32 %v289, %v1326
    %1328 = vdwg.mxu0
    %1329 = vmatprep.subr.bf16.mxu0 %v955
    %1330 = vmatpush1.bf16.msra.mxu0 %v954
    %1331 = vmatprep.subr.bf16.mxu0 %v959
    %1332 = vmatpush1.bf16.msra.mxu0 %v958
    %1333 = vmatprep.subr.bf16.mxu0 %v963
    %1334 = vmatpush1.bf16.msra.mxu0 %v962
    %1335 = vmatprep.subr.bf16.mxu0 %v967
    %1336 = vmatpush1.bf16.msra.mxu0 %v966
    %1337 = vmatprep.subr.bf16.mxu0 %v971
    %1338 = vmatpush1.bf16.msra.mxu0 %v970
    %1339 = vmatprep.subr.bf16.mxu0 %v975
    %1340 = vmatpush1.bf16.msra.mxu0 %v974
    %1341 = vmatprep.subr.bf16.mxu0 %v979
    %1342 = vmatpush1.bf16.msra.mxu0 %v978
    %1343 = vmatprep.subr.bf16.mxu0 %v983
    %1344 = vmatpush1.bf16.msra.mxu0 %v982
    %1345 = vmatprep.subr.bf16.mxu0 %v987
    %1346 = vmatpush1.bf16.msra.mxu0 %v986
    %1347 = vmatprep.subr.bf16.mxu0 %v991
    %1348 = vmatpush1.bf16.msra.mxu0 %v990
    %1349 = vmatprep.subr.bf16.mxu0 %v995
    %1350 = vmatpush1.bf16.msra.mxu0 %v994
    %1351 = vmatprep.subr.bf16.mxu0 %v999
    %1352 = vmatpush1.bf16.msra.mxu0 %v998
    %1353 = vmatprep.subr.bf16.mxu0 %v1003
    %1354 = vmatpush1.bf16.msra.mxu0 %v1002
    %1355 = vmatprep.subr.bf16.mxu0 %v1007
    %1356 = vmatpush1.bf16.msra.mxu0 %v1006
    %1357 = vmatprep.subr.bf16.mxu0 %v1011
    %1358 = vmatpush1.bf16.msra.mxu0 %v1010
    %1359 = vmatprep.subr.bf16.mxu0 %v1015
    %1360 = vmatpush1.bf16.msra.mxu0 %v1014
    %1361 = vmatprep.mubr.bf16.mxu0 %v80
    %1362 = vmatmul.mubr.bf16.gmra.mrb[0].mxu0 %v79
    %v1363 = vpop.f32.mrb[0].mxu0
    %v1364 = vadd.f32 %v1321, %v1363
    %v1365 = vpop.f32.mrb[0].mxu0
    %v1366 = vadd.f32 %v1323, %v1365
    %v1367 = vpop.f32.mrb[0].mxu0
    %v1368 = vadd.f32 %v1325, %v1367
    %v1369 = vpop.f32.mrb[0].mxu0
    %v1370 = vadd.f32 %v1327, %v1369
    %1371 = vdwg.mxu0
    %1372 = vmatprep.subr.bf16.mxu0 %v1019
    %1373 = vmatpush1.bf16.msra.mxu0 %v1018
    %1374 = vmatprep.subr.bf16.mxu0 %v1023
    %1375 = vmatpush1.bf16.msra.mxu0 %v1022
    %1376 = vmatprep.subr.bf16.mxu0 %v1027
    %1377 = vmatpush1.bf16.msra.mxu0 %v1026
    %1378 = vmatprep.subr.bf16.mxu0 %v1031
    %1379 = vmatpush1.bf16.msra.mxu0 %v1030
    %1380 = vmatprep.subr.bf16.mxu0 %v1035
    %1381 = vmatpush1.bf16.msra.mxu0 %v1034
    %1382 = vmatprep.subr.bf16.mxu0 %v1039
    %1383 = vmatpush1.bf16.msra.mxu0 %v1038
    %1384 = vmatprep.subr.bf16.mxu0 %v1043
    %1385 = vmatpush1.bf16.msra.mxu0 %v1042
    %1386 = vmatprep.subr.bf16.mxu0 %v1047
    %1387 = vmatpush1.bf16.msra.mxu0 %v1046
    %1388 = vmatprep.subr.bf16.mxu0 %v1051
    %1389 = vmatpush1.bf16.msra.mxu0 %v1050
    %1390 = vmatprep.subr.bf16.mxu0 %v1055
    %1391 = vmatpush1.bf16.msra.mxu0 %v1054
    %1392 = vmatprep.subr.bf16.mxu0 %v1059
    %1393 = vmatpush1.bf16.msra.mxu0 %v1058
    %1394 = vmatprep.subr.bf16.mxu0 %v1063
    %1395 = vmatpush1.bf16.msra.mxu0 %v1062
    %1396 = vmatprep.subr.bf16.mxu0 %v1067
    %1397 = vmatpush1.bf16.msra.mxu0 %v1066
    %1398 = vmatprep.subr.bf16.mxu0 %v1071
    %1399 = vmatpush1.bf16.msra.mxu0 %v1070
    %1400 = vmatprep.subr.bf16.mxu0 %v1075
    %1401 = vmatpush1.bf16.msra.mxu0 %v1074
    %1402 = vmatprep.subr.bf16.mxu0 %v1079
    %1403 = vmatpush1.bf16.msra.mxu0 %v1078
    %1404 = vmatprep.mubr.bf16.mxu0 %v82
    %1405 = vmatmul.mubr.bf16.gmra.mrb[0].mxu0 %v81
    %v1406 = vpop.f32.mrb[0].mxu0
    %v1407 = vadd.f32 %v1364, %v1406
    %v1408 = vpop.f32.mrb[0].mxu0
    %v1409 = vadd.f32 %v1366, %v1408
    %v1410 = vpop.f32.mrb[0].mxu0
    %v1411 = vadd.f32 %v1368, %v1410
    %v1412 = vpop.f32.mrb[0].mxu0
    %v1413 = vadd.f32 %v1370, %v1412
    %1414 = vdwg.mxu0
    %1415 = vmatprep.subr.bf16.mxu0 %v1083
    %1416 = vmatpush1.bf16.msra.mxu0 %v1082
    %1417 = vmatprep.subr.bf16.mxu0 0
    %1418 = vmatpush1.bf16.msra.mxu0 0
    %1419 = vmatprep.subr.bf16.mxu0 0
    %1420 = vmatpush1.bf16.msra.mxu0 0
    %1421 = vmatprep.subr.bf16.mxu0 0
    %1422 = vmatpush1.bf16.msra.mxu0 0
    %1423 = vmatprep.subr.bf16.mxu0 0
    %1424 = vmatpush1.bf16.msra.mxu0 0
    %1425 = vmatprep.subr.bf16.mxu0 0
    %1426 = vmatpush1.bf16.msra.mxu0 0
    %1427 = vmatprep.subr.bf16.mxu0 0
    %1428 = vmatpush1.bf16.msra.mxu0 0
    %1429 = vmatprep.subr.bf16.mxu0 0
    %1430 = vmatpush1.bf16.msra.mxu0 0
    %1431 = vmatprep.subr.bf16.mxu0 0
    %1432 = vmatpush1.bf16.msra.mxu0 0
    %1433 = vmatprep.subr.bf16.mxu0 0
    %1434 = vmatpush1.bf16.msra.mxu0 0
    %1435 = vmatprep.subr.bf16.mxu0 0
    %1436 = vmatpush1.bf16.msra.mxu0 0
    %1437 = vmatprep.subr.bf16.mxu0 0
    %1438 = vmatpush1.bf16.msra.mxu0 0
    %1439 = vmatprep.subr.bf16.mxu0 0
    %1440 = vmatpush1.bf16.msra.mxu0 0
    %1441 = vmatprep.subr.bf16.mxu0 0
    %1442 = vmatpush1.bf16.msra.mxu0 0
    %1443 = vmatprep.subr.bf16.mxu0 0
    %1444 = vmatpush1.bf16.msra.mxu0 0
    %1445 = vmatprep.subr.bf16.mxu0 0
    %1446 = vmatpush1.bf16.msra.mxu0 0
    %1447 = vmatprep.mubr.bf16.mxu0 0
    %1448 = vmatmul.mubr.bf16.gmra.mrb[0].mxu0 %v1284
    %v1449 = vpop.f32.mrb[0].mxu0
    %v1450 = vadd.f32 %v1407, %v1449
    %v1451 = vpop.f32.mrb[0].mxu0
    %v1452 = vadd.f32 %v1409, %v1451
    %v1453 = vpop.f32.mrb[0].mxu0
    %v1454 = vadd.f32 %v1411, %v1453
    %v1455 = vpop.f32.mrb[0].mxu0
    %v1456 = vadd.f32 %v1413, %v1455
    %1457 = vdwg.mxu0
    %1458 = vmatprep.subr.bf16.mxu0 %v893
    %1459 = vmatpush1.bf16.msra.mxu0 %v892
    %1460 = vmatprep.subr.bf16.mxu0 %v897
    %1461 = vmatpush1.bf16.msra.mxu0 %v896
    %1462 = vmatprep.subr.bf16.mxu0 %v901
    %1463 = vmatpush1.bf16.msra.mxu0 %v900
    %1464 = vmatprep.subr.bf16.mxu0 %v905
    %1465 = vmatpush1.bf16.msra.mxu0 %v904
    %1466 = vmatprep.subr.bf16.mxu0 %v909
    %1467 = vmatpush1.bf16.msra.mxu0 %v908
    %1468 = vmatprep.subr.bf16.mxu0 %v913
    %1469 = vmatpush1.bf16.msra.mxu0 %v912
    %1470 = vmatprep.subr.bf16.mxu0 %v917
    %1471 = vmatpush1.bf16.msra.mxu0 %v916
    %1472 = vmatprep.subr.bf16.mxu0 %v921
    %1473 = vmatpush1.bf16.msra.mxu0 %v920
    %1474 = vmatprep.subr.bf16.mxu0 %v925
    %1475 = vmatpush1.bf16.msra.mxu0 %v924
    %1476 = vmatprep.subr.bf16.mxu0 %v929
    %1477 = vmatpush1.bf16.msra.mxu0 %v928
    %1478 = vmatprep.subr.bf16.mxu0 %v933
    %1479 = vmatpush1.bf16.msra.mxu0 %v932
    %1480 = vmatprep.subr.bf16.mxu0 %v937
    %1481 = vmatpush1.bf16.msra.mxu0 %v936
    %1482 = vmatprep.subr.bf16.mxu0 %v941
    %1483 = vmatpush1.bf16.msra.mxu0 %v940
    %1484 = vmatprep.subr.bf16.mxu0 %v945
    %1485 = vmatpush1.bf16.msra.mxu0 %v944
    %1486 = vmatprep.subr.bf16.mxu0 %v949
    %1487 = vmatpush1.bf16.msra.mxu0 %v948
    %1488 = vmatprep.subr.bf16.mxu0 %v953
    %1489 = vmatpush1.bf16.msra.mxu0 %v952
    %1490 = vmatprep.mubr.bf16.mxu0 %v78
    %1491 = vmatmul.mubr.bf16.gmra.mrb[0].mxu0 %v77
    %v1492 = vpop.f32.mrb[0].mxu0
    %v1493 = vadd.f32 %v293, %v1492
    %v1494 = vpop.f32.mrb[0].mxu0
    %v1495 = vadd.f32 %v297, %v1494
    %v1496 = vpop.f32.mrb[0].mxu0
    %v1497 = vadd.f32 %v293, %v1496
    %v1498 = vpop.f32.mrb[0].mxu0
    %v1499 = vadd.f32 %v297, %v1498
    %1500 = vdwg.mxu0
    %1501 = vmatprep.subr.bf16.mxu0 %v957
    %1502 = vmatpush1.bf16.msra.mxu0 %v956
    %1503 = vmatprep.subr.bf16.mxu0 %v961
    %1504 = vmatpush1.bf16.msra.mxu0 %v960
    %1505 = vmatprep.subr.bf16.mxu0 %v965
    %1506 = vmatpush1.bf16.msra.mxu0 %v964
    %1507 = vmatprep.subr.bf16.mxu0 %v969
    %1508 = vmatpush1.bf16.msra.mxu0 %v968
    %1509 = vmatprep.subr.bf16.mxu0 %v973
    %1510 = vmatpush1.bf16.msra.mxu0 %v972
    %1511 = vmatprep.subr.bf16.mxu0 %v977
    %1512 = vmatpush1.bf16.msra.mxu0 %v976
    %1513 = vmatprep.subr.bf16.mxu0 %v981
    %1514 = vmatpush1.bf16.msra.mxu0 %v980
    %1515 = vmatprep.subr.bf16.mxu0 %v985
    %1516 = vmatpush1.bf16.msra.mxu0 %v984
    %1517 = vmatprep.subr.bf16.mxu0 %v989
    %1518 = vmatpush1.bf16.msra.mxu0 %v988
    %1519 = vmatprep.subr.bf16.mxu0 %v993
    %1520 = vmatpush1.bf16.msra.mxu0 %v992
    %1521 = vmatprep.subr.bf16.mxu0 %v997
    %1522 = vmatpush1.bf16.msra.mxu0 %v996
    %1523 = vmatprep.subr.bf16.mxu0 %v1001
    %1524 = vmatpush1.bf16.msra.mxu0 %v1000
    %1525 = vmatprep.subr.bf16.mxu0 %v1005
    %1526 = vmatpush1.bf16.msra.mxu0 %v1004
    %1527 = vmatprep.subr.bf16.mxu0 %v1009
    %1528 = vmatpush1.bf16.msra.mxu0 %v1008
    %1529 = vmatprep.subr.bf16.mxu0 %v1013
    %1530 = vmatpush1.bf16.msra.mxu0 %v1012
    %1531 = vmatprep.subr.bf16.mxu0 %v1017
    %1532 = vmatpush1.bf16.msra.mxu0 %v1016
    %1533 = vmatprep.mubr.bf16.mxu0 %v80
    %1534 = vmatmul.mubr.bf16.gmra.mrb[0].mxu0 %v79
    %v1535 = vpop.f32.mrb[0].mxu0
    %v1536 = vadd.f32 %v1493, %v1535
    %v1537 = vpop.f32.mrb[0].mxu0
    %v1538 = vadd.f32 %v1495, %v1537
    %v1539 = vpop.f32.mrb[0].mxu0
    %v1540 = vadd.f32 %v1497, %v1539
    %v1541 = vpop.f32.mrb[0].mxu0
    %v1542 = vadd.f32 %v1499, %v1541
    %1543 = vdwg.mxu0
    %1544 = vmatprep.subr.bf16.mxu0 %v1021
    %1545 = vmatpush1.bf16.msra.mxu0 %v1020
    %1546 = vmatprep.subr.bf16.mxu0 %v1025
    %1547 = vmatpush1.bf16.msra.mxu0 %v1024
    %1548 = vmatprep.subr.bf16.mxu0 %v1029
    %1549 = vmatpush1.bf16.msra.mxu0 %v1028
    %1550 = vmatprep.subr.bf16.mxu0 %v1033
    %1551 = vmatpush1.bf16.msra.mxu0 %v1032
    %1552 = vmatprep.subr.bf16.mxu0 %v1037
    %1553 = vmatpush1.bf16.msra.mxu0 %v1036
    %1554 = vmatprep.subr.bf16.mxu0 %v1041
    %1555 = vmatpush1.bf16.msra.mxu0 %v1040
    %1556 = vmatprep.subr.bf16.mxu0 %v1045
    %1557 = vmatpush1.bf16.msra.mxu0 %v1044
    %1558 = vmatprep.subr.bf16.mxu0 %v1049
    %1559 = vmatpush1.bf16.msra.mxu0 %v1048
    %1560 = vmatprep.subr.bf16.mxu0 %v1053
    %1561 = vmatpush1.bf16.msra.mxu0 %v1052
    %1562 = vmatprep.subr.bf16.mxu0 %v1057
    %1563 = vmatpush1.bf16.msra.mxu0 %v1056
    %1564 = vmatprep.subr.bf16.mxu0 %v1061
    %1565 = vmatpush1.bf16.msra.mxu0 %v1060
    %1566 = vmatprep.subr.bf16.mxu0 %v1065
    %1567 = vmatpush1.bf16.msra.mxu0 %v1064
    %1568 = vmatprep.subr.bf16.mxu0 %v1069
    %1569 = vmatpush1.bf16.msra.mxu0 %v1068
    %1570 = vmatprep.subr.bf16.mxu0 %v1073
    %1571 = vmatpush1.bf16.msra.mxu0 %v1072
    %1572 = vmatprep.subr.bf16.mxu0 %v1077
    %1573 = vmatpush1.bf16.msra.mxu0 %v1076
    %1574 = vmatprep.subr.bf16.mxu0 %v1081
    %1575 = vmatpush1.bf16.msra.mxu0 %v1080
    %1576 = vmatprep.mubr.bf16.mxu0 %v82
    %1577 = vmatmul.mubr.bf16.gmra.mrb[0].mxu0 %v81
    %v1578 = vpop.f32.mrb[0].mxu0
    %v1579 = vadd.f32 %v1536, %v1578
    %v1580 = vpop.f32.mrb[0].mxu0
    %v1581 = vadd.f32 %v1538, %v1580
    %v1582 = vpop.f32.mrb[0].mxu0
    %v1583 = vadd.f32 %v1540, %v1582
    %v1584 = vpop.f32.mrb[0].mxu0
    %v1585 = vadd.f32 %v1542, %v1584
    %1586 = vdwg.mxu0
    %1587 = vmatprep.subr.bf16.mxu0 %v1085
    %1588 = vmatpush1.bf16.msra.mxu0 %v1084
    %1589 = vmatprep.subr.bf16.mxu0 0
    %1590 = vmatpush1.bf16.msra.mxu0 0
    %1591 = vmatprep.subr.bf16.mxu0 0
    %1592 = vmatpush1.bf16.msra.mxu0 0
    %1593 = vmatprep.subr.bf16.mxu0 0
    %1594 = vmatpush1.bf16.msra.mxu0 0
    %1595 = vmatprep.subr.bf16.mxu0 0
    %1596 = vmatpush1.bf16.msra.mxu0 0
    %1597 = vmatprep.subr.bf16.mxu0 0
    %1598 = vmatpush1.bf16.msra.mxu0 0
    %1599 = vmatprep.subr.bf16.mxu0 0
    %1600 = vmatpush1.bf16.msra.mxu0 0
    %1601 = vmatprep.subr.bf16.mxu0 0
    %1602 = vmatpush1.bf16.msra.mxu0 0
    %1603 = vmatprep.subr.bf16.mxu0 0
    %1604 = vmatpush1.bf16.msra.mxu0 0
    %1605 = vmatprep.subr.bf16.mxu0 0
    %1606 = vmatpush1.bf16.msra.mxu0 0
    %1607 = vmatprep.subr.bf16.mxu0 0
    %1608 = vmatpush1.bf16.msra.mxu0 0
    %1609 = vmatprep.subr.bf16.mxu0 0
    %1610 = vmatpush1.bf16.msra.mxu0 0
    %1611 = vmatprep.subr.bf16.mxu0 0
    %1612 = vmatpush1.bf16.msra.mxu0 0
    %1613 = vmatprep.subr.bf16.mxu0 0
    %1614 = vmatpush1.bf16.msra.mxu0 0
    %1615 = vmatprep.subr.bf16.mxu0 0
    %1616 = vmatpush1.bf16.msra.mxu0 0
    %1617 = vmatprep.subr.bf16.mxu0 0
    %1618 = vmatpush1.bf16.msra.mxu0 0
    %1619 = vmatprep.mubr.bf16.mxu0 0
    %1620 = vmatmul.mubr.bf16.gmra.mrb[0].mxu0 %v1284
    %v1621 = vpop.f32.mrb[0].mxu0
    %v1622 = vadd.f32 %v1579, %v1621
    %v1623 = vpop.f32.mrb[0].mxu0
    %v1624 = vadd.f32 %v1581, %v1623
    %v1625 = vpop.f32.mrb[0].mxu0
    %v1626 = vadd.f32 %v1583, %v1625
    %v1627 = vpop.f32.mrb[0].mxu0
    %v1628 = vadd.f32 %v1585, %v1627
    %1629 = vdwg.mxu0
    %vm1630 = vcmp.gt.f32.partialorder %v1450, 0.0
    %vm1631 = vcmp.gt.f32.partialorder %v1452, 0.0
    %vm1632 = vcmp.gt.f32.partialorder %v1622, 0.0
    %vm1633 = vcmp.gt.f32.partialorder %v1624, 0.0
    %vm1634 = vcmp.gt.f32.partialorder %v1454, 0.0
    %vm1635 = vcmp.gt.f32.partialorder %v1456, 0.0
    %vm1636 = vcmp.gt.f32.partialorder %v1626, 0.0
    %vm1637 = vcmp.gt.f32.partialorder %v1628, 0.0
    %v1638 = vmul.f32 %v1450, 0.2
    %v1639 = vmul.f32 %v1452, 0.2
    %v1640 = vmul.f32 %v1622, 0.2
    %v1641 = vmul.f32 %v1624, 0.2
    %v1642 = vmul.f32 %v1454, 0.2
    %v1643 = vmul.f32 %v1456, 0.2
    %v1644 = vmul.f32 %v1626, 0.2
    %v1645 = vmul.f32 %v1628, 0.2
    %v1646 = vsel %vm1630, %v1450, %v1638
    %v1647 = vsel %vm1631, %v1452, %v1639
    %v1648 = vsel %vm1632, %v1622, %v1640
    %v1649 = vsel %vm1633, %v1624, %v1641
    %v1650 = vsel %vm1634, %v1454, %v1642
    %v1651 = vsel %vm1635, %v1456, %v1643
    %v1652 = vsel %vm1636, %v1626, %v1644
    %v1653 = vsel %vm1637, %v1628, %v1645
    %v1654 = vpack.c.bf16 %v1650, %v1646
    %v1655 = vpack.c.bf16 %v1651, %v1647
    %v1656 = vpack.c.bf16 %v1652, %v1648
    %v1657 = vpack.c.bf16 %v1653, %v1649
    %v1658 = vld [vmem:[#allocation7] sm:$0xf]
    %v1659 = vld [vmem:[#allocation7 + $0x4] sm:$0xf]
    %v1660 = vld [vmem:[#allocation7 + $0x8] sm:$0xf]
    %v1661 = vld [vmem:[#allocation7 + $0xc] sm:$0xf]
    %v1662 = vld [vmem:[#allocation7 + $0x10] sm:$0xf]
    %v1663 = vld [vmem:[#allocation7 + $0x14] sm:$0xf]
    %v1664 = vld [vmem:[#allocation7 + $0x18] sm:$0xf]
    %v1665 = vld [vmem:[#allocation7 + $0x1c] sm:$0xf]
    %v1666 = vld [vmem:[#allocation7 + $0x20] sm:$0xf]
    %v1667 = vld [vmem:[#allocation7 + $0x24] sm:$0xf]
    %v1668 = vld [vmem:[#allocation7 + $0x28] sm:$0xf]
    %v1669 = vld [vmem:[#allocation7 + $0x2c] sm:$0xf]
    %v1670 = vld [vmem:[#allocation7 + $0x30] sm:$0xf]
    %v1671 = vld [vmem:[#allocation7 + $0x34] sm:$0xf]
    %v1672 = vld [vmem:[#allocation7 + $0x38] sm:$0xf]
    %v1673 = vld [vmem:[#allocation7 + $0x3c] sm:$0xf]
    %v1674 = vld [vmem:[#allocation7 + $0x40] sm:$0xf]
    %v1675 = vld [vmem:[#allocation7 + $0x44] sm:$0xf]
    %v1676 = vld [vmem:[#allocation7 + $0x48] sm:$0xf]
    %v1677 = vld [vmem:[#allocation7 + $0x4c] sm:$0xf]
    %v1678 = vld [vmem:[#allocation7 + $0x50] sm:$0xf]
    %v1679 = vld [vmem:[#allocation7 + $0x54] sm:$0xf]
    %v1680 = vld [vmem:[#allocation7 + $0x58] sm:$0xf]
    %v1681 = vld [vmem:[#allocation7 + $0x5c] sm:$0xf]
    %v1682 = vld [vmem:[#allocation7 + $0x60] sm:$0xf]
    %v1683 = vld [vmem:[#allocation7 + $0x64] sm:$0xf]
    %v1684 = vld [vmem:[#allocation7 + $0x68] sm:$0xf]
    %v1685 = vld [vmem:[#allocation7 + $0x6c] sm:$0xf]
    %v1686 = vld [vmem:[#allocation7 + $0x70] sm:$0xf]
    %v1687 = vld [vmem:[#allocation7 + $0x74] sm:$0xf]
    %v1688 = vld [vmem:[#allocation7 + $0x78] sm:$0xf]
    %v1689 = vld [vmem:[#allocation7 + $0x7c] sm:$0xf]
    %v1690 = vld [vmem:[#allocation7 + $0x80] sm:$0xf]
    %v1691 = vld [vmem:[#allocation7 + $0x84] sm:$0xf]
    %v1692 = vld [vmem:[#allocation7 + $0x88] sm:$0xf]
    %v1693 = vld [vmem:[#allocation7 + $0x8c] sm:$0xf]
    %v1694 = vld [vmem:[#allocation7 + $0x90] sm:$0xf]
    %v1695 = vld [vmem:[#allocation7 + $0x94] sm:$0xf]
    %v1696 = vld [vmem:[#allocation7 + $0x98] sm:$0xf]
    %v1697 = vld [vmem:[#allocation7 + $0x9c] sm:$0xf]
    %v1698 = vld [vmem:[#allocation7 + $0xa0] sm:$0xf]
    %v1699 = vld [vmem:[#allocation7 + $0xa4] sm:$0xf]
    %v1700 = vld [vmem:[#allocation7 + $0xa8] sm:$0xf]
    %v1701 = vld [vmem:[#allocation7 + $0xac] sm:$0xf]
    %v1702 = vld [vmem:[#allocation7 + $0xb0] sm:$0xf]
    %v1703 = vld [vmem:[#allocation7 + $0xb4] sm:$0xf]
    %v1704 = vld [vmem:[#allocation7 + $0xb8] sm:$0xf]
    %v1705 = vld [vmem:[#allocation7 + $0xbc] sm:$0xf]
    %v1706 = vld [vmem:[#allocation7 + $0xc0] sm:$0xf]
    %v1707 = vld [vmem:[#allocation7 + $0xc4] sm:$0xf]
    %v1708 = vld [vmem:[#allocation7 + $0xc8] sm:$0xf]
    %v1709 = vld [vmem:[#allocation7 + $0xcc] sm:$0xf]
    %v1710 = vld [vmem:[#allocation7 + $0xd0] sm:$0xf]
    %v1711 = vld [vmem:[#allocation7 + $0xd4] sm:$0xf]
    %v1712 = vld [vmem:[#allocation7 + $0xd8] sm:$0xf]
    %v1713 = vld [vmem:[#allocation7 + $0xdc] sm:$0xf]
    %v1714 = vld [vmem:[#allocation7 + $0xe0] sm:$0xf]
    %v1715 = vld [vmem:[#allocation7 + $0xe4] sm:$0xf]
    %v1716 = vld [vmem:[#allocation7 + $0xe8] sm:$0xf]
    %v1717 = vld [vmem:[#allocation7 + $0xec] sm:$0xf]
    %v1718 = vld [vmem:[#allocation7 + $0xf0] sm:$0xf]
    %v1719 = vld [vmem:[#allocation7 + $0xf4] sm:$0xf]
    %v1720 = vld [vmem:[#allocation7 + $0xf8] sm:$0xf]
    %v1721 = vld [vmem:[#allocation7 + $0xfc] sm:$0xf]
    %v1722 = vld [vmem:[%s4] sm:$0x1]
    %v1724 = vlaneseq
    %v1725 = vshrl.u32 %v1724, 7
    %v1726 = vsub.s32 0, %v1725
    %v1727 = vrot.slane %v1722, %v1726
    %v1793 = vunpack.c.l.b16 %v1658
    %v1794 = vunpack.c.l.b16 %v1659
    %v1795 = vunpack.c.l.b16 %v1660
    %v1796 = vunpack.c.l.b16 %v1661
    %v1797 = vunpack.c.l.b16 %v1662
    %v1798 = vunpack.c.l.b16 %v1663
    %v1799 = vunpack.c.l.b16 %v1664
    %v1800 = vunpack.c.l.b16 %v1665
    %v1801 = vunpack.c.l.b16 %v1666
    %v1802 = vunpack.c.l.b16 %v1667
    %v1803 = vunpack.c.l.b16 %v1668
    %v1804 = vunpack.c.l.b16 %v1669
    %v1805 = vunpack.c.l.b16 %v1670
    %v1806 = vunpack.c.l.b16 %v1671
    %v1807 = vunpack.c.l.b16 %v1672
    %v1808 = vunpack.c.l.b16 %v1673
    %v1809 = vunpack.c.l.b16 %v1674
    %v1810 = vunpack.c.l.b16 %v1675
    %v1811 = vunpack.c.l.b16 %v1676
    %v1812 = vunpack.c.l.b16 %v1677
    %v1813 = vunpack.c.l.b16 %v1678
    %v1814 = vunpack.c.l.b16 %v1679
    %v1815 = vunpack.c.l.b16 %v1680
    %v1816 = vunpack.c.l.b16 %v1681
    %v1817 = vunpack.c.l.b16 %v1682
    %v1818 = vunpack.c.l.b16 %v1683
    %v1819 = vunpack.c.l.b16 %v1684
    %v1820 = vunpack.c.l.b16 %v1685
    %v1821 = vunpack.c.l.b16 %v1686
    %v1822 = vunpack.c.l.b16 %v1687
    %v1823 = vunpack.c.l.b16 %v1688
    %v1824 = vunpack.c.l.b16 %v1689
    %v1825 = vunpack.c.l.b16 %v1690
    %v1826 = vunpack.c.l.b16 %v1691
    %v1827 = vunpack.c.l.b16 %v1692
    %v1828 = vunpack.c.l.b16 %v1693
    %v1829 = vunpack.c.l.b16 %v1694
    %v1830 = vunpack.c.l.b16 %v1695
    %v1831 = vunpack.c.l.b16 %v1696
    %v1832 = vunpack.c.l.b16 %v1697
    %v1833 = vunpack.c.l.b16 %v1698
    %v1834 = vunpack.c.l.b16 %v1699
    %v1835 = vunpack.c.l.b16 %v1700
    %v1836 = vunpack.c.l.b16 %v1701
    %v1837 = vunpack.c.l.b16 %v1702
    %v1838 = vunpack.c.l.b16 %v1703
    %v1839 = vunpack.c.l.b16 %v1704
    %v1840 = vunpack.c.l.b16 %v1705
    %v1841 = vunpack.c.l.b16 %v1706
    %v1842 = vunpack.c.l.b16 %v1707
    %v1843 = vunpack.c.l.b16 %v1708
    %v1844 = vunpack.c.l.b16 %v1709
    %v1845 = vunpack.c.l.b16 %v1710
    %v1846 = vunpack.c.l.b16 %v1711
    %v1847 = vunpack.c.l.b16 %v1712
    %v1848 = vunpack.c.l.b16 %v1713
    %v1849 = vunpack.c.l.b16 %v1714
    %v1850 = vunpack.c.l.b16 %v1715
    %v1851 = vunpack.c.l.b16 %v1716
    %v1852 = vunpack.c.l.b16 %v1717
    %v1853 = vunpack.c.l.b16 %v1718
    %v1854 = vunpack.c.l.b16 %v1719
    %v1855 = vunpack.c.l.b16 %v1720
    %v1856 = vunpack.c.l.b16 %v1721
    %v1857 = vpack.c.b16 %v1794, %v1793
    %v1858 = vpack.c.b16 %v1796, %v1795
    %v1859 = vpack.c.b16 %v1798, %v1797
    %v1860 = vpack.c.b16 %v1800, %v1799
    %v1861 = vpack.c.b16 %v1802, %v1801
    %v1862 = vpack.c.b16 %v1804, %v1803
    %v1863 = vpack.c.b16 %v1806, %v1805
    %v1864 = vpack.c.b16 %v1808, %v1807
    %v1865 = vpack.c.b16 %v1810, %v1809
    %v1866 = vpack.c.b16 %v1812, %v1811
    %v1867 = vpack.c.b16 %v1814, %v1813
    %v1868 = vpack.c.b16 %v1816, %v1815
    %v1869 = vpack.c.b16 %v1818, %v1817
    %v1870 = vpack.c.b16 %v1820, %v1819
    %v1871 = vpack.c.b16 %v1822, %v1821
    %v1872 = vpack.c.b16 %v1824, %v1823
    %v1873 = vpack.c.b16 %v1826, %v1825
    %v1874 = vpack.c.b16 %v1828, %v1827
    %v1875 = vpack.c.b16 %v1830, %v1829
    %v1876 = vpack.c.b16 %v1832, %v1831
    %v1877 = vpack.c.b16 %v1834, %v1833
    %v1878 = vpack.c.b16 %v1836, %v1835
    %v1879 = vpack.c.b16 %v1838, %v1837
    %v1880 = vpack.c.b16 %v1840, %v1839
    %v1881 = vpack.c.b16 %v1842, %v1841
    %v1882 = vpack.c.b16 %v1844, %v1843
    %v1883 = vpack.c.b16 %v1846, %v1845
    %v1884 = vpack.c.b16 %v1848, %v1847
    %v1885 = vpack.c.b16 %v1850, %v1849
    %v1886 = vpack.c.b16 %v1852, %v1851
    %v1887 = vpack.c.b16 %v1854, %v1853
    %v1888 = vpack.c.b16 %v1856, %v1855
    %1921 = vmatprep.subr.bf16.mxu0 0
    %1922 = vmatpush1.bf16.msra.mxu0 %v1857
    %1923 = vmatprep.subr.bf16.mxu0 0
    %1924 = vmatpush1.bf16.msra.mxu0 %v1858
    %1925 = vmatprep.subr.bf16.mxu0 0
    %1926 = vmatpush1.bf16.msra.mxu0 %v1859
    %1927 = vmatprep.subr.bf16.mxu0 0
    %1928 = vmatpush1.bf16.msra.mxu0 %v1860
    %1929 = vmatprep.subr.bf16.mxu0 0
    %1930 = vmatpush1.bf16.msra.mxu0 %v1861
    %1931 = vmatprep.subr.bf16.mxu0 0
    %1932 = vmatpush1.bf16.msra.mxu0 %v1862
    %1933 = vmatprep.subr.bf16.mxu0 0
    %1934 = vmatpush1.bf16.msra.mxu0 %v1863
    %1935 = vmatprep.subr.bf16.mxu0 0
    %1936 = vmatpush1.bf16.msra.mxu0 %v1864
    %1937 = vmatprep.subr.bf16.mxu0 0
    %1938 = vmatpush1.bf16.msra.mxu0 %v1865
    %1939 = vmatprep.subr.bf16.mxu0 0
    %1940 = vmatpush1.bf16.msra.mxu0 %v1866
    %1941 = vmatprep.subr.bf16.mxu0 0
    %1942 = vmatpush1.bf16.msra.mxu0 %v1867
    %1943 = vmatprep.subr.bf16.mxu0 0
    %1944 = vmatpush1.bf16.msra.mxu0 %v1868
    %1945 = vmatprep.subr.bf16.mxu0 0
    %1946 = vmatpush1.bf16.msra.mxu0 %v1869
    %1947 = vmatprep.subr.bf16.mxu0 0
    %1948 = vmatpush1.bf16.msra.mxu0 %v1870
    %1949 = vmatprep.subr.bf16.mxu0 0
    %1950 = vmatpush1.bf16.msra.mxu0 %v1871
    %1951 = vmatprep.subr.bf16.mxu0 0
    %1952 = vmatpush1.bf16.msra.mxu0 %v1872
    %1953 = vmatprep.mubr.bf16.mxu0 %v1655
    %1954 = vmatmul.mubr.bf16.gmra.mrb[0].mxu0 %v1654
    %v1955 = vpop.f32.mrb[0].mxu0
    %v1956 = vadd.f32 %v1727, %v1955
    %v1957 = vpop.f32.mrb[0].mxu0
    %v1958 = vpop.f32.mrb[0].mxu0
    %v1959 = vadd.f32 %v1727, %v1958
    %v1960 = vpop.f32.mrb[0].mxu0
    %1961 = vdwg.mxu0
    %1962 = vmatprep.subr.bf16.mxu0 0
    %1963 = vmatpush1.bf16.msra.mxu0 %v1873
    %1964 = vmatprep.subr.bf16.mxu0 0
    %1965 = vmatpush1.bf16.msra.mxu0 %v1874
    %1966 = vmatprep.subr.bf16.mxu0 0
    %1967 = vmatpush1.bf16.msra.mxu0 %v1875
    %1968 = vmatprep.subr.bf16.mxu0 0
    %1969 = vmatpush1.bf16.msra.mxu0 %v1876
    %1970 = vmatprep.subr.bf16.mxu0 0
    %1971 = vmatpush1.bf16.msra.mxu0 %v1877
    %1972 = vmatprep.subr.bf16.mxu0 0
    %1973 = vmatpush1.bf16.msra.mxu0 %v1878
    %1974 = vmatprep.subr.bf16.mxu0 0
    %1975 = vmatpush1.bf16.msra.mxu0 %v1879
    %1976 = vmatprep.subr.bf16.mxu0 0
    %1977 = vmatpush1.bf16.msra.mxu0 %v1880
    %1978 = vmatprep.subr.bf16.mxu0 0
    %1979 = vmatpush1.bf16.msra.mxu0 %v1881
    %1980 = vmatprep.subr.bf16.mxu0 0
    %1981 = vmatpush1.bf16.msra.mxu0 %v1882
    %1982 = vmatprep.subr.bf16.mxu0 0
    %1983 = vmatpush1.bf16.msra.mxu0 %v1883
    %1984 = vmatprep.subr.bf16.mxu0 0
    %1985 = vmatpush1.bf16.msra.mxu0 %v1884
    %1986 = vmatprep.subr.bf16.mxu0 0
    %1987 = vmatpush1.bf16.msra.mxu0 %v1885
    %1988 = vmatprep.subr.bf16.mxu0 0
    %1989 = vmatpush1.bf16.msra.mxu0 %v1886
    %1990 = vmatprep.subr.bf16.mxu0 0
    %1991 = vmatpush1.bf16.msra.mxu0 %v1887
    %1992 = vmatprep.subr.bf16.mxu0 0
    %1993 = vmatpush1.bf16.msra.mxu0 %v1888
    %1994 = vmatprep.mubr.bf16.mxu0 %v1657
    %1995 = vmatmul.mubr.bf16.gmra.mrb[0].mxu0 %v1656
    %v1996 = vpop.f32.mrb[0].mxu0
    %v1997 = vadd.f32 %v1956, %v1996
    %v1998 = vpop.f32.mrb[0].mxu0
    %v1999 = vpop.f32.mrb[0].mxu0
    %v2000 = vadd.f32 %v1959, %v1999
    %v2001 = vpop.f32.mrb[0].mxu0
    %2002 = vdwg.mxu0
    %2003 = vst [vmem:[#allocation8] sm:$0xff] %v1997
    %2004 = vst [vmem:[#allocation8 + $0x8] sm:$0xff] %v2000
    // Predicated region
    $region34: #{tpu_custom_call.1} parent=1 // pred_check
      _
    $region35: #{tpu_custom_call.1} parent=1 // pred_check_branch
      %2006 = sbr.rel (0) target = $region37
    $region36: #{tpu_custom_call.1} parent=1 // pred_region
      %s2008 = ssub.s32 256, 128
      %2009 = vsyncadd [#allocation4], %s2008
      %s2010 = sshll.u32 [#allocation8], 4
      %s2011 = int_to_ptr.vmem [resolvable:$true] %s2010
      %2016 = dma.vmem_to_hbm [thread:$0]  %s2011, 128, %s5, [#allocation4], 128, 128, 8
    $region37: #{tpu_custom_call.1} parent=1 // pred_fallthru
      _
    // Predicated region
    $region38: #{tpu_custom_call.1} parent=1 // pred_check
      _
    $region39: #{tpu_custom_call.1} parent=1 // pred_check_branch
      %2018 = sbr.rel (0) target = $region41
    $region40: #{tpu_custom_call.1} parent=1 // pred_region
      %2019 = dma.done [#allocation4], 256
    $region41: #{tpu_custom_call.1} parent=1 // pred_fallthru
      _
    %2020 = vsyncpa [#allocation3], 1
    %2021 = vsyncpa [#allocation6], 1
    %2022 = vsyncpa [#allocation4], 1

</llo_original>
